<compile_context>
chip_gen: v5e
topology: v5e:2x2
jax: 0.10.0
libtpu: 0.0.40
codegen_flags: <defaults>
</compile_context>

<pallas_src>
import math
import functools

import jax
import jax.numpy as jnp
from jax.experimental import pallas as pl
from jax.experimental.pallas import tpu as pltpu

LANE = 128


def transformer_kernel(x_ref, pe_ref, enc_w_ref, enc_b_ref,
                       wqkv_ref, bqkv_ref, wo_ref, bo_ref,
                       lin1_w_ref, lin1_b_ref, lin2_w_ref, lin2_b_ref,
                       n1_w_ref, n1_b_ref, n2_w_ref, n2_b_ref,
                       dec_w_ref, dec_b_ref, out_ref,
                       *, B, S, D, Dp, QKVp, H, L):
    N = B * S
    dh = D // H
    inv_D = 1.0 / D
    f32 = jnp.float32
    bf16 = jnp.bfloat16

    def layernorm(y, w, b, eps=1e-5):
        # Padded lanes (>= D) are exactly zero, so full-row sums equal sums over
        # the real D features; biased variance via E[x^2] - mu^2 (PyTorch LN).
        mu = jnp.sum(y, axis=-1, keepdims=True) * inv_D
        var = jnp.sum(y * y, axis=-1, keepdims=True) * inv_D - mu * mu
        return (y - mu) * jax.lax.rsqrt(var + eps) * w + b

    # encoder Linear (bf16 MXU, f32 accumulate) + positional encoding
    x = jnp.dot(x_ref[...], enc_w_ref[...], preferred_element_type=f32)
    x = x + enc_b_ref[...]
    x = (x.reshape(B, S, Dp) + pe_ref[...][None, :, :]).reshape(N, Dp)
    # TODO(synk): dropout omitted (inference mode).

    for l in range(L):  # L is small; keep unrolled (switch to fori_loop if L grows)
        xb = x.astype(bf16)

        # ---- fused q/k/v projection: ONE 128-wide MXU push per layer.
        # Output lanes: [q(0:D) | k(D:2D) | v(2D:3D) | zero pad]; 1/sqrt(dh)
        # already folded into the q block of wqkv/bqkv in the wrapper.
        qkv = jnp.dot(xb, wqkv_ref[l], preferred_element_type=f32) + bqkv_ref[l]
        qkv3 = qkv.reshape(B, S, QKVp).astype(bf16)   # single reshape + single cast

        # ---- multi-head self attention: per-head static lane slices of the
        # fused projection; scores / softmax / PV batched over B via einsum.
        outs = []
        for h in range(H):
            q = qkv3[:, :, h * dh:(h + 1) * dh]                    # (B, S, dh)
            k = qkv3[:, :, D + h * dh:D + (h + 1) * dh]
            v = qkv3[:, :, 2 * D + h * dh:2 * D + (h + 1) * dh]

            s = jnp.einsum('bqd,bkd->bqk', q, k, preferred_element_type=f32)
            s = s - jnp.max(s, axis=-1, keepdims=True)
            p = jnp.exp(s)
            p = p * pl.reciprocal(jnp.sum(p, axis=-1, keepdims=True), approx=True)
            outs.append(jnp.einsum('bqk,bkd->bqd', p.astype(bf16), v,
                                   preferred_element_type=f32))

        # head outputs lane-contiguous (N, H*dh) -> ONE output-projection matmul
        o_all = jnp.concatenate(outs, axis=-1).reshape(N, D).astype(bf16)
        attn = jnp.dot(o_all, wo_ref[l], preferred_element_type=f32) + bo_ref[l]
        x = layernorm(x + attn, n1_w_ref[l], n1_b_ref[l])

        # ---- feed forward (relu), lane-dense 128-wide hidden ----
        h1 = jnp.dot(x.astype(bf16), lin1_w_ref[l], preferred_element_type=f32)
        h1 = jnp.maximum(h1 + lin1_b_ref[l], 0.0)
        ff = jnp.dot(h1.astype(bf16), lin2_w_ref[l], preferred_element_type=f32)
        ff = ff + lin2_b_ref[l]
        x = layernorm(x + ff, n2_w_ref[l], n2_b_ref[l])

    # output.mean(axis=1): mean over the batch axis of the (S, B, D) layout
    pooled = jnp.mean(x.reshape(B, S, Dp), axis=0)          # (S, Dp)

    # decoder Linear, stored lane-dense (S, 128); sliced to n_class outside.
    out_ref[...] = (jnp.dot(pooled.astype(bf16), dec_w_ref[...],
                            preferred_element_type=f32) + dec_b_ref[...])


def _rpad(n, m=LANE):
    return ((n + m - 1) // m) * m


def _pad_last2(a, rows, cols):
    pad = [(0, 0)] * (a.ndim - 2) + [(0, rows - a.shape[-2]),
                                     (0, cols - a.shape[-1])]
    return jnp.pad(a, pad)


def pack_params(params, *, n_head, seq_len):
    """One-time weight padding / packing (hoisted off the per-invocation path)."""
    n_inp, D = params["enc_w"].shape
    L = params["wq"].shape[0]
    H1 = params["lin1_w"].shape[2]
    n_class = params["dec_w"].shape[1]
    H = n_head
    dh = D // H

    Dp, H1p, Cp, QKVp = _rpad(D), _rpad(H1), _rpad(n_class), _rpad(3 * D)
    f32, bf16 = jnp.float32, jnp.bfloat16
    scale = 1.0 / math.sqrt(dh)

    # PositionalEncoding buffer, reproduced literally from the module:
    # only even columns get sin(position * div_term); odd columns stay zero.
    pos = jnp.arange(seq_len, dtype=f32)[:, None]
    div = jnp.exp(jnp.arange(0, D, 2, dtype=f32) * (-math.log(10000.0) / D))
    pe = jnp.zeros((seq_len, D), f32).at[:, 0::2].set(jnp.sin(pos * div))

    # Fused qkv weights: (L, Dp, QKVp) with output lanes [q | k | v | 0-pad],
    # 1/sqrt(dh) folded into the q block.
    wqkv = jnp.concatenate([params["wq"] * scale, params["wk"], params["wv"]],
                           axis=-1)                             # (L, D, 3D)
    bqkv = jnp.concatenate([params["bq"] * scale, params["bk"], params["bv"]],
                           axis=-1)                             # (L, 3D)

    return dict(
        dims=dict(S=seq_len, D=D, Dp=Dp, QKVp=QKVp, Cp=Cp, H=H, L=L,
                  n_class=n_class, n_inp=n_inp),
        pe=_pad_last2(pe, seq_len, Dp),
        enc_w=_pad_last2(params["enc_w"], n_inp, Dp).astype(bf16),
        enc_b=_pad_last2(params["enc_b"][None, :], 1, Dp),
        wqkv=_pad_last2(wqkv, Dp, QKVp).astype(bf16),
        bqkv=_pad_last2(bqkv[:, None, :], 1, QKVp),
        wo=_pad_last2(params["wo"], D, Dp).astype(bf16),
        bo=_pad_last2(params["bo"][:, None, :], 1, Dp),
        lin1_w=_pad_last2(params["lin1_w"], Dp, H1p).astype(bf16),
        lin1_b=_pad_last2(params["lin1_b"][:, None, :], 1, H1p),
        lin2_w=_pad_last2(params["lin2_w"], H1p, Dp).astype(bf16),
        lin2_b=_pad_last2(params["lin2_b"][:, None, :], 1, Dp),
        n1_w=_pad_last2(params["n1_w"][:, None, :], 1, Dp),
        n1_b=_pad_last2(params["n1_b"][:, None, :], 1, Dp),
        n2_w=_pad_last2(params["n2_w"][:, None, :], 1, Dp),
        n2_b=_pad_last2(params["n2_b"][:, None, :], 1, Dp),
        dec_w=_pad_last2(params["dec_w"], Dp, Cp).astype(bf16),
        dec_b=_pad_last2(params["dec_b"][None, :], 1, Cp),
    )


def transformer_forward(src, packed):
    d = packed["dims"]
    S, B, n_inp = src.shape
    assert S == d["S"] and n_inp == d["n_inp"]
    N = B * S
    Cp = d["Cp"]

    # Per-invocation work is just this transpose + the pallas_call.
    # (S, B, n_inp) -> batch-major 2D slab (B*S, n_inp), bf16 for the MXU.
    x2d = jnp.transpose(src, (1, 0, 2)).reshape(N, n_inp).astype(jnp.bfloat16)

    inputs = [x2d, packed["pe"], packed["enc_w"], packed["enc_b"],
              packed["wqkv"], packed["bqkv"], packed["wo"], packed["bo"],
              packed["lin1_w"], packed["lin1_b"], packed["lin2_w"], packed["lin2_b"],
              packed["n1_w"], packed["n1_b"], packed["n2_w"], packed["n2_b"],
              packed["dec_w"], packed["dec_b"]]

    def full_spec(shape):
        nd = len(shape)

        def imap(i):
            return (0,) * nd

        return pl.BlockSpec(shape, imap)

    kern = functools.partial(transformer_kernel,
                             B=B, S=S, D=d["D"], Dp=d["Dp"], QKVp=d["QKVp"],
                             H=d["H"], L=d["L"])

    out = pl.pallas_call(
        kern,
        out_shape=jax.ShapeDtypeStruct((S, Cp), jnp.float32),
        grid=(1,),
        in_specs=[full_spec(a.shape) for a in inputs],
        out_specs=full_spec((S, Cp)),
        compiler_params=pltpu.CompilerParams(dimension_semantics=("arbitrary",)),
    )(*inputs)

    return out[:, :d["n_class"]]


if __name__ == "__main__":
    # Module hyperparameters (the PyTorch module requires n_hid_0 == n_hid_1
    # for the decoder Linear(n_hid_1, n_class) to be shape-consistent).
    S, B = 8, 2
    n_class, n_inp, n_hid_0, n_hid_1, n_head, n_layers = 10, 16, 32, 32, 4, 2
    D, H1, L = n_hid_0, n_hid_1, n_layers

    key = jax.random.PRNGKey(0)
    ks = jax.random.split(key, 20)
    u = lambda k, shape: jax.random.uniform(k, shape, jnp.float32, -0.1, 0.1)

    # Deterministic synthetic parameters (weights pre-transposed to (in, out)).
    params = dict(
        enc_w=u(ks[0], (n_inp, D)),
        enc_b=u(ks[1], (D,)),
        wq=u(ks[2], (L, D, D)), bq=u(ks[3], (L, D)),
        wk=u(ks[4], (L, D, D)), bk=u(ks[5], (L, D)),
        wv=u(ks[6], (L, D, D)), bv=u(ks[7], (L, D)),
        wo=u(ks[8], (L, D, D)), bo=u(ks[9], (L, D)),
        lin1_w=u(ks[10], (L, D, H1)), lin1_b=u(ks[11], (L, H1)),
        lin2_w=u(ks[12], (L, H1, D)), lin2_b=u(ks[13], (L, D)),
        n1_w=jnp.ones((L, D), jnp.float32), n1_b=jnp.zeros((L, D), jnp.float32),
        n2_w=jnp.ones((L, D), jnp.float32), n2_b=jnp.zeros((L, D), jnp.float32),
        dec_w=u(ks[14], (H1, n_class)),
        dec_b=jnp.zeros((n_class,), jnp.float32),  # decoder.bias.data.zero_()
    )

    src = jax.random.normal(ks[15], (S, B, n_inp), jnp.float32)

    packed = pack_params(params, n_head=n_head, seq_len=S)   # one-time packing
    out = transformer_forward(src, packed)
    jax.block_until_ready(out)
    assert out.shape == (S, n_class)
    assert bool(jnp.all(jnp.isfinite(out)))
    print("KERNEL_OK")
</pallas_src>

<mosaic_0001>
module attributes {stable_mosaic.version = 11 : i64} {
  func.func @transformer_kernel(%arg0: i32, %arg1: memref<16x16xbf16, #tpu.memory_space<vmem>>, %arg2: memref<8x128xf32, #tpu.memory_space<vmem>>, %arg3: memref<16x128xbf16, #tpu.memory_space<vmem>>, %arg4: memref<1x128xf32, #tpu.memory_space<vmem>>, %arg5: memref<2x128x128xbf16, #tpu.memory_space<vmem>>, %arg6: memref<2x1x128xf32, #tpu.memory_space<vmem>>, %arg7: memref<2x32x128xbf16, #tpu.memory_space<vmem>>, %arg8: memref<2x1x128xf32, #tpu.memory_space<vmem>>, %arg9: memref<2x128x128xbf16, #tpu.memory_space<vmem>>, %arg10: memref<2x1x128xf32, #tpu.memory_space<vmem>>, %arg11: memref<2x128x128xbf16, #tpu.memory_space<vmem>>, %arg12: memref<2x1x128xf32, #tpu.memory_space<vmem>>, %arg13: memref<2x1x128xf32, #tpu.memory_space<vmem>>, %arg14: memref<2x1x128xf32, #tpu.memory_space<vmem>>, %arg15: memref<2x1x128xf32, #tpu.memory_space<vmem>>, %arg16: memref<2x1x128xf32, #tpu.memory_space<vmem>>, %arg17: memref<128x128xbf16, #tpu.memory_space<vmem>>, %arg18: memref<1x128xf32, #tpu.memory_space<vmem>>, %arg19: memref<8x128xf32, #tpu.memory_space<vmem>>) attributes {dimension_semantics = [#tpu.dimension_semantics<arbitrary>], iteration_bounds = array<i64: 1>, scalar_prefetch = 0 : i64, scratch_operands = 0 : i64, tpu.core_type = #tpu.core_type<tc>, window_params = [{pipeline_mode = #tpu.pipeline_mode<synchronous>, transform_indices = @transform_0, window_bounds = array<i64: 16, 16>}, {pipeline_mode = #tpu.pipeline_mode<synchronous>, transform_indices = @transform_1, window_bounds = array<i64: 8, 128>}, {pipeline_mode = #tpu.pipeline_mode<synchronous>, transform_indices = @transform_2, window_bounds = array<i64: 16, 128>}, {pipeline_mode = #tpu.pipeline_mode<synchronous>, transform_indices = @transform_3, window_bounds = array<i64: 1, 128>}, {pipeline_mode = #tpu.pipeline_mode<synchronous>, transform_indices = @transform_4, window_bounds = array<i64: 2, 128, 128>}, {pipeline_mode = #tpu.pipeline_mode<synchronous>, transform_indices = @transform_5, window_bounds = array<i64: 2, 1, 128>}, {pipeline_mode = #tpu.pipeline_mode<synchronous>, transform_indices = @transform_6, window_bounds = array<i64: 2, 32, 128>}, {pipeline_mode = #tpu.pipeline_mode<synchronous>, transform_indices = @transform_7, window_bounds = array<i64: 2, 1, 128>}, {pipeline_mode = #tpu.pipeline_mode<synchronous>, transform_indices = @transform_8, window_bounds = array<i64: 2, 128, 128>}, {pipeline_mode = #tpu.pipeline_mode<synchronous>, transform_indices = @transform_9, window_bounds = array<i64: 2, 1, 128>}, {pipeline_mode = #tpu.pipeline_mode<synchronous>, transform_indices = @transform_10, window_bounds = array<i64: 2, 128, 128>}, {pipeline_mode = #tpu.pipeline_mode<synchronous>, transform_indices = @transform_11, window_bounds = array<i64: 2, 1, 128>}, {pipeline_mode = #tpu.pipeline_mode<synchronous>, transform_indices = @transform_12, window_bounds = array<i64: 2, 1, 128>}, {pipeline_mode = #tpu.pipeline_mode<synchronous>, transform_indices = @transform_13, window_bounds = array<i64: 2, 1, 128>}, {pipeline_mode = #tpu.pipeline_mode<synchronous>, transform_indices = @transform_14, window_bounds = array<i64: 2, 1, 128>}, {pipeline_mode = #tpu.pipeline_mode<synchronous>, transform_indices = @transform_15, window_bounds = array<i64: 2, 1, 128>}, {pipeline_mode = #tpu.pipeline_mode<synchronous>, transform_indices = @transform_16, window_bounds = array<i64: 128, 128>}, {pipeline_mode = #tpu.pipeline_mode<synchronous>, transform_indices = @transform_17, window_bounds = array<i64: 1, 128>}, {pipeline_mode = #tpu.pipeline_mode<synchronous>, transform_indices = @transform_18, window_bounds = array<i64: 8, 128>}]} {
    %c0 = arith.constant 0 : index
    %c0_0 = arith.constant 0 : index
    %0 = vector.load %arg1[%c0, %c0_0] : memref<16x16xbf16, #tpu.memory_space<vmem>>, vector<16x16xbf16>
    %c0_1 = arith.constant 0 : index
    %c0_2 = arith.constant 0 : index
    %1 = vector.load %arg3[%c0_1, %c0_2] : memref<16x128xbf16, #tpu.memory_space<vmem>>, vector<16x128xbf16>
    %cst = arith.constant dense<0.000000e+00> : vector<16x128xf32>
    %2 = tpu.matmul %0, %1, %cst {dimension_numbers = #tpu.dot_dimension_numbers<[1], [0], [0], [1], [0, 0, 1, 1], [], []>} : vector<16x16xbf16>, vector<16x128xbf16>, vector<16x128xf32> -> vector<16x128xf32>
    %c0_3 = arith.constant 0 : index
    %c0_4 = arith.constant 0 : index
    %3 = vector.load %arg4[%c0_3, %c0_4] : memref<1x128xf32, #tpu.memory_space<vmem>>, vector<1x128xf32>
    %4 = vector.broadcast %3 : vector<1x128xf32> to vector<16x128xf32>
    %5 = arith.addf %2, %4 : vector<16x128xf32>
    %6 = vector.shape_cast %5 : vector<16x128xf32> to vector<2x8x128xf32>
    %c0_5 = arith.constant 0 : index
    %c0_6 = arith.constant 0 : index
    %7 = vector.load %arg2[%c0_5, %c0_6] : memref<8x128xf32, #tpu.memory_space<vmem>>, vector<8x128xf32>
    %8 = vector.shape_cast %7 : vector<8x128xf32> to vector<1x8x128xf32>
    %9 = vector.broadcast %8 : vector<1x8x128xf32> to vector<2x8x128xf32>
    %10 = arith.addf %6, %9 : vector<2x8x128xf32>
    %11 = vector.shape_cast %10 : vector<2x8x128xf32> to vector<16x128xf32>
    %12 = arith.truncf %11 : vector<16x128xf32> to vector<16x128xbf16>
    %c0_7 = arith.constant 0 : index
    %c0_8 = arith.constant 0 : index
    %c0_9 = arith.constant 0 : index
    %13 = vector.load %arg5[%c0_7, %c0_8, %c0_9] : memref<2x128x128xbf16, #tpu.memory_space<vmem>>, vector<1x128x128xbf16>
    %14 = vector.shape_cast %13 : vector<1x128x128xbf16> to vector<128x128xbf16>
    %cst_10 = arith.constant dense<0.000000e+00> : vector<16x128xf32>
    %15 = tpu.matmul %12, %14, %cst_10 {dimension_numbers = #tpu.dot_dimension_numbers<[1], [0], [0], [1], [0, 0, 1, 1], [], []>} : vector<16x128xbf16>, vector<128x128xbf16>, vector<16x128xf32> -> vector<16x128xf32>
    %c0_11 = arith.constant 0 : index
    %c0_12 = arith.constant 0 : index
    %c0_13 = arith.constant 0 : index
    %16 = vector.load %arg6[%c0_11, %c0_12, %c0_13] : memref<2x1x128xf32, #tpu.memory_space<vmem>>, vector<1x1x128xf32>
    %17 = vector.shape_cast %16 : vector<1x1x128xf32> to vector<1x128xf32>
    %18 = vector.broadcast %17 : vector<1x128xf32> to vector<16x128xf32>
    %19 = arith.addf %15, %18 : vector<16x128xf32>
    %20 = vector.shape_cast %19 : vector<16x128xf32> to vector<2x8x128xf32>
    %21 = arith.truncf %20 : vector<2x8x128xf32> to vector<2x8x128xbf16>
    %22 = vector.extract_strided_slice %21 {offsets = [0, 0, 0], sizes = [2, 8, 8], strides = [1, 1, 1]} : vector<2x8x128xbf16> to vector<2x8x8xbf16>
    %23 = vector.extract_strided_slice %21 {offsets = [0, 0, 32], sizes = [2, 8, 8], strides = [1, 1, 1]} : vector<2x8x128xbf16> to vector<2x8x8xbf16>
    %24 = vector.extract_strided_slice %21 {offsets = [0, 0, 64], sizes = [2, 8, 8], strides = [1, 1, 1]} : vector<2x8x128xbf16> to vector<2x8x8xbf16>
    "tpu.trace_start"() <{level = 10 : i32, message = "bqd,bkd->bqk"}> : () -> ()
    %cst_14 = arith.constant dense<0.000000e+00> : vector<2x8x8xf32>
    %25 = tpu.matmul %22, %23, %cst_14 {dimension_numbers = #tpu.dot_dimension_numbers<[2], [2], [1], [1], [0, 0, 0, 1, 1, 1], [0], [0]>} : vector<2x8x8xbf16>, vector<2x8x8xbf16>, vector<2x8x8xf32> -> vector<2x8x8xf32>
    "tpu.trace_stop"() : () -> ()
    %cst_15 = arith.constant dense<0xFF800000> : vector<2x8xf32>
    %26 = vector.multi_reduction <maximumf>, %25, %cst_15 [2] : vector<2x8x8xf32> to vector<2x8xf32>
    %27 = vector.shape_cast %26 : vector<2x8xf32> to vector<2x8x1xf32>
    %28 = vector.broadcast %27 : vector<2x8x1xf32> to vector<2x8x8xf32>
    %29 = arith.subf %25, %28 : vector<2x8x8xf32>
    %30 = math.exp %29 : vector<2x8x8xf32>
    %cst_16 = arith.constant dense<0.000000e+00> : vector<2x8xf32>
    %31 = vector.multi_reduction <add>, %30, %cst_16 [2] : vector<2x8x8xf32> to vector<2x8xf32>
    %32 = vector.shape_cast %31 : vector<2x8xf32> to vector<2x8x1xf32>
    %33 = tpu.reciprocal %32 {approx = true} : vector<2x8x1xf32> -> vector<2x8x1xf32>
    %34 = vector.broadcast %33 : vector<2x8x1xf32> to vector<2x8x8xf32>
    %35 = arith.mulf %30, %34 : vector<2x8x8xf32>
    %36 = arith.truncf %35 : vector<2x8x8xf32> to vector<2x8x8xbf16>
    "tpu.trace_start"() <{level = 10 : i32, message = "bqk,bkd->bqd"}> : () -> ()
    %cst_17 = arith.constant dense<0.000000e+00> : vector<2x8x8xf32>
    %37 = tpu.matmul %36, %24, %cst_17 {dimension_numbers = #tpu.dot_dimension_numbers<[2], [1], [1], [2], [0, 0, 0, 1, 1, 2], [0], [0]>} : vector<2x8x8xbf16>, vector<2x8x8xbf16>, vector<2x8x8xf32> -> vector<2x8x8xf32>
    "tpu.trace_stop"() : () -> ()
    %38 = vector.extract_strided_slice %21 {offsets = [0, 0, 8], sizes = [2, 8, 8], strides = [1, 1, 1]} : vector<2x8x128xbf16> to vector<2x8x8xbf16>
    %39 = vector.extract_strided_slice %21 {offsets = [0, 0, 40], sizes = [2, 8, 8], strides = [1, 1, 1]} : vector<2x8x128xbf16> to vector<2x8x8xbf16>
    %40 = vector.extract_strided_slice %21 {offsets = [0, 0, 72], sizes = [2, 8, 8], strides = [1, 1, 1]} : vector<2x8x128xbf16> to vector<2x8x8xbf16>
    "tpu.trace_start"() <{level = 10 : i32, message = "bqd,bkd->bqk"}> : () -> ()
    %cst_18 = arith.constant dense<0.000000e+00> : vector<2x8x8xf32>
    %41 = tpu.matmul %38, %39, %cst_18 {dimension_numbers = #tpu.dot_dimension_numbers<[2], [2], [1], [1], [0, 0, 0, 1, 1, 1], [0], [0]>} : vector<2x8x8xbf16>, vector<2x8x8xbf16>, vector<2x8x8xf32> -> vector<2x8x8xf32>
    "tpu.trace_stop"() : () -> ()
    %cst_19 = arith.constant dense<0xFF800000> : vector<2x8xf32>
    %42 = vector.multi_reduction <maximumf>, %41, %cst_19 [2] : vector<2x8x8xf32> to vector<2x8xf32>
    %43 = vector.shape_cast %42 : vector<2x8xf32> to vector<2x8x1xf32>
    %44 = vector.broadcast %43 : vector<2x8x1xf32> to vector<2x8x8xf32>
    %45 = arith.subf %41, %44 : vector<2x8x8xf32>
    %46 = math.exp %45 : vector<2x8x8xf32>
    %cst_20 = arith.constant dense<0.000000e+00> : vector<2x8xf32>
    %47 = vector.multi_reduction <add>, %46, %cst_20 [2] : vector<2x8x8xf32> to vector<2x8xf32>
    %48 = vector.shape_cast %47 : vector<2x8xf32> to vector<2x8x1xf32>
    %49 = tpu.reciprocal %48 {approx = true} : vector<2x8x1xf32> -> vector<2x8x1xf32>
    %50 = vector.broadcast %49 : vector<2x8x1xf32> to vector<2x8x8xf32>
    %51 = arith.mulf %46, %50 : vector<2x8x8xf32>
    %52 = arith.truncf %51 : vector<2x8x8xf32> to vector<2x8x8xbf16>
    "tpu.trace_start"() <{level = 10 : i32, message = "bqk,bkd->bqd"}> : () -> ()
    %cst_21 = arith.constant dense<0.000000e+00> : vector<2x8x8xf32>
    %53 = tpu.matmul %52, %40, %cst_21 {dimension_numbers = #tpu.dot_dimension_numbers<[2], [1], [1], [2], [0, 0, 0, 1, 1, 2], [0], [0]>} : vector<2x8x8xbf16>, vector<2x8x8xbf16>, vector<2x8x8xf32> -> vector<2x8x8xf32>
    "tpu.trace_stop"() : () -> ()
    %54 = vector.extract_strided_slice %21 {offsets = [0, 0, 16], sizes = [2, 8, 8], strides = [1, 1, 1]} : vector<2x8x128xbf16> to vector<2x8x8xbf16>
    %55 = vector.extract_strided_slice %21 {offsets = [0, 0, 48], sizes = [2, 8, 8], strides = [1, 1, 1]} : vector<2x8x128xbf16> to vector<2x8x8xbf16>
    %56 = vector.extract_strided_slice %21 {offsets = [0, 0, 80], sizes = [2, 8, 8], strides = [1, 1, 1]} : vector<2x8x128xbf16> to vector<2x8x8xbf16>
    "tpu.trace_start"() <{level = 10 : i32, message = "bqd,bkd->bqk"}> : () -> ()
    %cst_22 = arith.constant dense<0.000000e+00> : vector<2x8x8xf32>
    %57 = tpu.matmul %54, %55, %cst_22 {dimension_numbers = #tpu.dot_dimension_numbers<[2], [2], [1], [1], [0, 0, 0, 1, 1, 1], [0], [0]>} : vector<2x8x8xbf16>, vector<2x8x8xbf16>, vector<2x8x8xf32> -> vector<2x8x8xf32>
    "tpu.trace_stop"() : () -> ()
    %cst_23 = arith.constant dense<0xFF800000> : vector<2x8xf32>
    %58 = vector.multi_reduction <maximumf>, %57, %cst_23 [2] : vector<2x8x8xf32> to vector<2x8xf32>
    %59 = vector.shape_cast %58 : vector<2x8xf32> to vector<2x8x1xf32>
    %60 = vector.broadcast %59 : vector<2x8x1xf32> to vector<2x8x8xf32>
    %61 = arith.subf %57, %60 : vector<2x8x8xf32>
    %62 = math.exp %61 : vector<2x8x8xf32>
    %cst_24 = arith.constant dense<0.000000e+00> : vector<2x8xf32>
    %63 = vector.multi_reduction <add>, %62, %cst_24 [2] : vector<2x8x8xf32> to vector<2x8xf32>
    %64 = vector.shape_cast %63 : vector<2x8xf32> to vector<2x8x1xf32>
    %65 = tpu.reciprocal %64 {approx = true} : vector<2x8x1xf32> -> vector<2x8x1xf32>
    %66 = vector.broadcast %65 : vector<2x8x1xf32> to vector<2x8x8xf32>
    %67 = arith.mulf %62, %66 : vector<2x8x8xf32>
    %68 = arith.truncf %67 : vector<2x8x8xf32> to vector<2x8x8xbf16>
    "tpu.trace_start"() <{level = 10 : i32, message = "bqk,bkd->bqd"}> : () -> ()
    %cst_25 = arith.constant dense<0.000000e+00> : vector<2x8x8xf32>
    %69 = tpu.matmul %68, %56, %cst_25 {dimension_numbers = #tpu.dot_dimension_numbers<[2], [1], [1], [2], [0, 0, 0, 1, 1, 2], [0], [0]>} : vector<2x8x8xbf16>, vector<2x8x8xbf16>, vector<2x8x8xf32> -> vector<2x8x8xf32>
    "tpu.trace_stop"() : () -> ()
    %70 = vector.extract_strided_slice %21 {offsets = [0, 0, 24], sizes = [2, 8, 8], strides = [1, 1, 1]} : vector<2x8x128xbf16> to vector<2x8x8xbf16>
    %71 = vector.extract_strided_slice %21 {offsets = [0, 0, 56], sizes = [2, 8, 8], strides = [1, 1, 1]} : vector<2x8x128xbf16> to vector<2x8x8xbf16>
    %72 = vector.extract_strided_slice %21 {offsets = [0, 0, 88], sizes = [2, 8, 8], strides = [1, 1, 1]} : vector<2x8x128xbf16> to vector<2x8x8xbf16>
    "tpu.trace_start"() <{level = 10 : i32, message = "bqd,bkd->bqk"}> : () -> ()
    %cst_26 = arith.constant dense<0.000000e+00> : vector<2x8x8xf32>
    %73 = tpu.matmul %70, %71, %cst_26 {dimension_numbers = #tpu.dot_dimension_numbers<[2], [2], [1], [1], [0, 0, 0, 1, 1, 1], [0], [0]>} : vector<2x8x8xbf16>, vector<2x8x8xbf16>, vector<2x8x8xf32> -> vector<2x8x8xf32>
    "tpu.trace_stop"() : () -> ()
    %cst_27 = arith.constant dense<0xFF800000> : vector<2x8xf32>
    %74 = vector.multi_reduction <maximumf>, %73, %cst_27 [2] : vector<2x8x8xf32> to vector<2x8xf32>
    %75 = vector.shape_cast %74 : vector<2x8xf32> to vector<2x8x1xf32>
    %76 = vector.broadcast %75 : vector<2x8x1xf32> to vector<2x8x8xf32>
    %77 = arith.subf %73, %76 : vector<2x8x8xf32>
    %78 = math.exp %77 : vector<2x8x8xf32>
    %cst_28 = arith.constant dense<0.000000e+00> : vector<2x8xf32>
    %79 = vector.multi_reduction <add>, %78, %cst_28 [2] : vector<2x8x8xf32> to vector<2x8xf32>
    %80 = vector.shape_cast %79 : vector<2x8xf32> to vector<2x8x1xf32>
    %81 = tpu.reciprocal %80 {approx = true} : vector<2x8x1xf32> -> vector<2x8x1xf32>
    %82 = vector.broadcast %81 : vector<2x8x1xf32> to vector<2x8x8xf32>
    %83 = arith.mulf %78, %82 : vector<2x8x8xf32>
    %84 = arith.truncf %83 : vector<2x8x8xf32> to vector<2x8x8xbf16>
    "tpu.trace_start"() <{level = 10 : i32, message = "bqk,bkd->bqd"}> : () -> ()
    %cst_29 = arith.constant dense<0.000000e+00> : vector<2x8x8xf32>
    %85 = tpu.matmul %84, %72, %cst_29 {dimension_numbers = #tpu.dot_dimension_numbers<[2], [1], [1], [2], [0, 0, 0, 1, 1, 2], [0], [0]>} : vector<2x8x8xbf16>, vector<2x8x8xbf16>, vector<2x8x8xf32> -> vector<2x8x8xf32>
    "tpu.trace_stop"() : () -> ()
    %86 = tpu.concatenate %37, %53, %69, %85 in 2 : vector<2x8x8xf32>, vector<2x8x8xf32>, vector<2x8x8xf32>, vector<2x8x8xf32> -> vector<2x8x32xf32>
    %87 = vector.shape_cast %86 : vector<2x8x32xf32> to vector<16x32xf32>
    %88 = arith.truncf %87 : vector<16x32xf32> to vector<16x32xbf16>
    %c0_30 = arith.constant 0 : index
    %c0_31 = arith.constant 0 : index
    %c0_32 = arith.constant 0 : index
    %89 = vector.load %arg7[%c0_30, %c0_31, %c0_32] : memref<2x32x128xbf16, #tpu.memory_space<vmem>>, vector<1x32x128xbf16>
    %90 = vector.shape_cast %89 : vector<1x32x128xbf16> to vector<32x128xbf16>
    %cst_33 = arith.constant dense<0.000000e+00> : vector<16x128xf32>
    %91 = tpu.matmul %88, %90, %cst_33 {dimension_numbers = #tpu.dot_dimension_numbers<[1], [0], [0], [1], [0, 0, 1, 1], [], []>} : vector<16x32xbf16>, vector<32x128xbf16>, vector<16x128xf32> -> vector<16x128xf32>
    %c0_34 = arith.constant 0 : index
    %c0_35 = arith.constant 0 : index
    %c0_36 = arith.constant 0 : index
    %92 = vector.load %arg8[%c0_34, %c0_35, %c0_36] : memref<2x1x128xf32, #tpu.memory_space<vmem>>, vector<1x1x128xf32>
    %93 = vector.shape_cast %92 : vector<1x1x128xf32> to vector<1x128xf32>
    %94 = vector.broadcast %93 : vector<1x128xf32> to vector<16x128xf32>
    %95 = arith.addf %91, %94 : vector<16x128xf32>
    %96 = arith.addf %11, %95 : vector<16x128xf32>
    %c0_37 = arith.constant 0 : index
    %c0_38 = arith.constant 0 : index
    %c0_39 = arith.constant 0 : index
    %97 = vector.load %arg13[%c0_37, %c0_38, %c0_39] : memref<2x1x128xf32, #tpu.memory_space<vmem>>, vector<1x1x128xf32>
    %98 = vector.shape_cast %97 : vector<1x1x128xf32> to vector<1x128xf32>
    %c0_40 = arith.constant 0 : index
    %c0_41 = arith.constant 0 : index
    %c0_42 = arith.constant 0 : index
    %99 = vector.load %arg14[%c0_40, %c0_41, %c0_42] : memref<2x1x128xf32, #tpu.memory_space<vmem>>, vector<1x1x128xf32>
    %100 = vector.shape_cast %99 : vector<1x1x128xf32> to vector<1x128xf32>
    %cst_43 = arith.constant dense<0.000000e+00> : vector<16xf32>
    %101 = vector.multi_reduction <add>, %96, %cst_43 [1] : vector<16x128xf32> to vector<16xf32>
    %102 = vector.shape_cast %101 : vector<16xf32> to vector<16x1xf32>
    %cst_44 = arith.constant 3.125000e-02 : f32
    %103 = vector.broadcast %cst_44 : f32 to vector<16x1xf32>
    %104 = arith.mulf %102, %103 : vector<16x1xf32>
    %105 = arith.mulf %96, %96 : vector<16x128xf32>
    %cst_45 = arith.constant dense<0.000000e+00> : vector<16xf32>
    %106 = vector.multi_reduction <add>, %105, %cst_45 [1] : vector<16x128xf32> to vector<16xf32>
    %107 = vector.shape_cast %106 : vector<16xf32> to vector<16x1xf32>
    %cst_46 = arith.constant 3.125000e-02 : f32
    %108 = vector.broadcast %cst_46 : f32 to vector<16x1xf32>
    %109 = arith.mulf %107, %108 : vector<16x1xf32>
    %110 = arith.mulf %104, %104 : vector<16x1xf32>
    %111 = arith.subf %109, %110 : vector<16x1xf32>
    %112 = vector.broadcast %104 : vector<16x1xf32> to vector<16x128xf32>
    %113 = arith.subf %96, %112 : vector<16x128xf32>
    %cst_47 = arith.constant 9.99999974E-6 : f32
    %114 = vector.broadcast %cst_47 : f32 to vector<16x1xf32>
    %115 = arith.addf %111, %114 : vector<16x1xf32>
    %116 = math.rsqrt %115 : vector<16x1xf32>
    %117 = vector.broadcast %116 : vector<16x1xf32> to vector<16x128xf32>
    %118 = arith.mulf %113, %117 : vector<16x128xf32>
    %119 = vector.broadcast %98 : vector<1x128xf32> to vector<16x128xf32>
    %120 = arith.mulf %118, %119 : vector<16x128xf32>
    %121 = vector.broadcast %100 : vector<1x128xf32> to vector<16x128xf32>
    %122 = arith.addf %120, %121 : vector<16x128xf32>
    %123 = arith.truncf %122 : vector<16x128xf32> to vector<16x128xbf16>
    %c0_48 = arith.constant 0 : index
    %c0_49 = arith.constant 0 : index
    %c0_50 = arith.constant 0 : index
    %124 = vector.load %arg9[%c0_48, %c0_49, %c0_50] : memref<2x128x128xbf16, #tpu.memory_space<vmem>>, vector<1x128x128xbf16>
    %125 = vector.shape_cast %124 : vector<1x128x128xbf16> to vector<128x128xbf16>
    %cst_51 = arith.constant dense<0.000000e+00> : vector<16x128xf32>
    %126 = tpu.matmul %123, %125, %cst_51 {dimension_numbers = #tpu.dot_dimension_numbers<[1], [0], [0], [1], [0, 0, 1, 1], [], []>} : vector<16x128xbf16>, vector<128x128xbf16>, vector<16x128xf32> -> vector<16x128xf32>
    %c0_52 = arith.constant 0 : index
    %c0_53 = arith.constant 0 : index
    %c0_54 = arith.constant 0 : index
    %127 = vector.load %arg10[%c0_52, %c0_53, %c0_54] : memref<2x1x128xf32, #tpu.memory_space<vmem>>, vector<1x1x128xf32>
    %128 = vector.shape_cast %127 : vector<1x1x128xf32> to vector<1x128xf32>
    %129 = vector.broadcast %128 : vector<1x128xf32> to vector<16x128xf32>
    %130 = arith.addf %126, %129 : vector<16x128xf32>
    %cst_55 = arith.constant 0.000000e+00 : f32
    %131 = vector.broadcast %cst_55 : f32 to vector<16x128xf32>
    %132 = arith.maximumf %130, %131 : vector<16x128xf32>
    %133 = arith.truncf %132 : vector<16x128xf32> to vector<16x128xbf16>
    %c0_56 = arith.constant 0 : index
    %c0_57 = arith.constant 0 : index
    %c0_58 = arith.constant 0 : index
    %134 = vector.load %arg11[%c0_56, %c0_57, %c0_58] : memref<2x128x128xbf16, #tpu.memory_space<vmem>>, vector<1x128x128xbf16>
    %135 = vector.shape_cast %134 : vector<1x128x128xbf16> to vector<128x128xbf16>
    %cst_59 = arith.constant dense<0.000000e+00> : vector<16x128xf32>
    %136 = tpu.matmul %133, %135, %cst_59 {dimension_numbers = #tpu.dot_dimension_numbers<[1], [0], [0], [1], [0, 0, 1, 1], [], []>} : vector<16x128xbf16>, vector<128x128xbf16>, vector<16x128xf32> -> vector<16x128xf32>
    %c0_60 = arith.constant 0 : index
    %c0_61 = arith.constant 0 : index
    %c0_62 = arith.constant 0 : index
    %137 = vector.load %arg12[%c0_60, %c0_61, %c0_62] : memref<2x1x128xf32, #tpu.memory_space<vmem>>, vector<1x1x128xf32>
    %138 = vector.shape_cast %137 : vector<1x1x128xf32> to vector<1x128xf32>
    %139 = vector.broadcast %138 : vector<1x128xf32> to vector<16x128xf32>
    %140 = arith.addf %136, %139 : vector<16x128xf32>
    %141 = arith.addf %122, %140 : vector<16x128xf32>
    %c0_63 = arith.constant 0 : index
    %c0_64 = arith.constant 0 : index
    %c0_65 = arith.constant 0 : index
    %142 = vector.load %arg15[%c0_63, %c0_64, %c0_65] : memref<2x1x128xf32, #tpu.memory_space<vmem>>, vector<1x1x128xf32>
    %143 = vector.shape_cast %142 : vector<1x1x128xf32> to vector<1x128xf32>
    %c0_66 = arith.constant 0 : index
    %c0_67 = arith.constant 0 : index
    %c0_68 = arith.constant 0 : index
    %144 = vector.load %arg16[%c0_66, %c0_67, %c0_68] : memref<2x1x128xf32, #tpu.memory_space<vmem>>, vector<1x1x128xf32>
    %145 = vector.shape_cast %144 : vector<1x1x128xf32> to vector<1x128xf32>
    %cst_69 = arith.constant dense<0.000000e+00> : vector<16xf32>
    %146 = vector.multi_reduction <add>, %141, %cst_69 [1] : vector<16x128xf32> to vector<16xf32>
    %147 = vector.shape_cast %146 : vector<16xf32> to vector<16x1xf32>
    %cst_70 = arith.constant 3.125000e-02 : f32
    %148 = vector.broadcast %cst_70 : f32 to vector<16x1xf32>
    %149 = arith.mulf %147, %148 : vector<16x1xf32>
    %150 = arith.mulf %141, %141 : vector<16x128xf32>
    %cst_71 = arith.constant dense<0.000000e+00> : vector<16xf32>
    %151 = vector.multi_reduction <add>, %150, %cst_71 [1] : vector<16x128xf32> to vector<16xf32>
    %152 = vector.shape_cast %151 : vector<16xf32> to vector<16x1xf32>
    %cst_72 = arith.constant 3.125000e-02 : f32
    %153 = vector.broadcast %cst_72 : f32 to vector<16x1xf32>
    %154 = arith.mulf %152, %153 : vector<16x1xf32>
    %155 = arith.mulf %149, %149 : vector<16x1xf32>
    %156 = arith.subf %154, %155 : vector<16x1xf32>
    %157 = vector.broadcast %149 : vector<16x1xf32> to vector<16x128xf32>
    %158 = arith.subf %141, %157 : vector<16x128xf32>
    %cst_73 = arith.constant 9.99999974E-6 : f32
    %159 = vector.broadcast %cst_73 : f32 to vector<16x1xf32>
    %160 = arith.addf %156, %159 : vector<16x1xf32>
    %161 = math.rsqrt %160 : vector<16x1xf32>
    %162 = vector.broadcast %161 : vector<16x1xf32> to vector<16x128xf32>
    %163 = arith.mulf %158, %162 : vector<16x128xf32>
    %164 = vector.broadcast %143 : vector<1x128xf32> to vector<16x128xf32>
    %165 = arith.mulf %163, %164 : vector<16x128xf32>
    %166 = vector.broadcast %145 : vector<1x128xf32> to vector<16x128xf32>
    %167 = arith.addf %165, %166 : vector<16x128xf32>
    %168 = arith.truncf %167 : vector<16x128xf32> to vector<16x128xbf16>
    %c1 = arith.constant 1 : index
    %c0_74 = arith.constant 0 : index
    %c0_75 = arith.constant 0 : index
    %169 = vector.load %arg5[%c1, %c0_74, %c0_75] : memref<2x128x128xbf16, #tpu.memory_space<vmem>>, vector<1x128x128xbf16>
    %170 = vector.shape_cast %169 : vector<1x128x128xbf16> to vector<128x128xbf16>
    %cst_76 = arith.constant dense<0.000000e+00> : vector<16x128xf32>
    %171 = tpu.matmul %168, %170, %cst_76 {dimension_numbers = #tpu.dot_dimension_numbers<[1], [0], [0], [1], [0, 0, 1, 1], [], []>} : vector<16x128xbf16>, vector<128x128xbf16>, vector<16x128xf32> -> vector<16x128xf32>
    %c1_77 = arith.constant 1 : index
    %c0_78 = arith.constant 0 : index
    %c0_79 = arith.constant 0 : index
    %172 = vector.load %arg6[%c1_77, %c0_78, %c0_79] : memref<2x1x128xf32, #tpu.memory_space<vmem>>, vector<1x1x128xf32>
    %173 = vector.shape_cast %172 : vector<1x1x128xf32> to vector<1x128xf32>
    %174 = vector.broadcast %173 : vector<1x128xf32> to vector<16x128xf32>
    %175 = arith.addf %171, %174 : vector<16x128xf32>
    %176 = vector.shape_cast %175 : vector<16x128xf32> to vector<2x8x128xf32>
    %177 = arith.truncf %176 : vector<2x8x128xf32> to vector<2x8x128xbf16>
    %178 = vector.extract_strided_slice %177 {offsets = [0, 0, 0], sizes = [2, 8, 8], strides = [1, 1, 1]} : vector<2x8x128xbf16> to vector<2x8x8xbf16>
    %179 = vector.extract_strided_slice %177 {offsets = [0, 0, 32], sizes = [2, 8, 8], strides = [1, 1, 1]} : vector<2x8x128xbf16> to vector<2x8x8xbf16>
    %180 = vector.extract_strided_slice %177 {offsets = [0, 0, 64], sizes = [2, 8, 8], strides = [1, 1, 1]} : vector<2x8x128xbf16> to vector<2x8x8xbf16>
    "tpu.trace_start"() <{level = 10 : i32, message = "bqd,bkd->bqk"}> : () -> ()
    %cst_80 = arith.constant dense<0.000000e+00> : vector<2x8x8xf32>
    %181 = tpu.matmul %178, %179, %cst_80 {dimension_numbers = #tpu.dot_dimension_numbers<[2], [2], [1], [1], [0, 0, 0, 1, 1, 1], [0], [0]>} : vector<2x8x8xbf16>, vector<2x8x8xbf16>, vector<2x8x8xf32> -> vector<2x8x8xf32>
    "tpu.trace_stop"() : () -> ()
    %cst_81 = arith.constant dense<0xFF800000> : vector<2x8xf32>
    %182 = vector.multi_reduction <maximumf>, %181, %cst_81 [2] : vector<2x8x8xf32> to vector<2x8xf32>
    %183 = vector.shape_cast %182 : vector<2x8xf32> to vector<2x8x1xf32>
    %184 = vector.broadcast %183 : vector<2x8x1xf32> to vector<2x8x8xf32>
    %185 = arith.subf %181, %184 : vector<2x8x8xf32>
    %186 = math.exp %185 : vector<2x8x8xf32>
    %cst_82 = arith.constant dense<0.000000e+00> : vector<2x8xf32>
    %187 = vector.multi_reduction <add>, %186, %cst_82 [2] : vector<2x8x8xf32> to vector<2x8xf32>
    %188 = vector.shape_cast %187 : vector<2x8xf32> to vector<2x8x1xf32>
    %189 = tpu.reciprocal %188 {approx = true} : vector<2x8x1xf32> -> vector<2x8x1xf32>
    %190 = vector.broadcast %189 : vector<2x8x1xf32> to vector<2x8x8xf32>
    %191 = arith.mulf %186, %190 : vector<2x8x8xf32>
    %192 = arith.truncf %191 : vector<2x8x8xf32> to vector<2x8x8xbf16>
    "tpu.trace_start"() <{level = 10 : i32, message = "bqk,bkd->bqd"}> : () -> ()
    %cst_83 = arith.constant dense<0.000000e+00> : vector<2x8x8xf32>
    %193 = tpu.matmul %192, %180, %cst_83 {dimension_numbers = #tpu.dot_dimension_numbers<[2], [1], [1], [2], [0, 0, 0, 1, 1, 2], [0], [0]>} : vector<2x8x8xbf16>, vector<2x8x8xbf16>, vector<2x8x8xf32> -> vector<2x8x8xf32>
    "tpu.trace_stop"() : () -> ()
    %194 = vector.extract_strided_slice %177 {offsets = [0, 0, 8], sizes = [2, 8, 8], strides = [1, 1, 1]} : vector<2x8x128xbf16> to vector<2x8x8xbf16>
    %195 = vector.extract_strided_slice %177 {offsets = [0, 0, 40], sizes = [2, 8, 8], strides = [1, 1, 1]} : vector<2x8x128xbf16> to vector<2x8x8xbf16>
    %196 = vector.extract_strided_slice %177 {offsets = [0, 0, 72], sizes = [2, 8, 8], strides = [1, 1, 1]} : vector<2x8x128xbf16> to vector<2x8x8xbf16>
    "tpu.trace_start"() <{level = 10 : i32, message = "bqd,bkd->bqk"}> : () -> ()
    %cst_84 = arith.constant dense<0.000000e+00> : vector<2x8x8xf32>
    %197 = tpu.matmul %194, %195, %cst_84 {dimension_numbers = #tpu.dot_dimension_numbers<[2], [2], [1], [1], [0, 0, 0, 1, 1, 1], [0], [0]>} : vector<2x8x8xbf16>, vector<2x8x8xbf16>, vector<2x8x8xf32> -> vector<2x8x8xf32>
    "tpu.trace_stop"() : () -> ()
    %cst_85 = arith.constant dense<0xFF800000> : vector<2x8xf32>
    %198 = vector.multi_reduction <maximumf>, %197, %cst_85 [2] : vector<2x8x8xf32> to vector<2x8xf32>
    %199 = vector.shape_cast %198 : vector<2x8xf32> to vector<2x8x1xf32>
    %200 = vector.broadcast %199 : vector<2x8x1xf32> to vector<2x8x8xf32>
    %201 = arith.subf %197, %200 : vector<2x8x8xf32>
    %202 = math.exp %201 : vector<2x8x8xf32>
    %cst_86 = arith.constant dense<0.000000e+00> : vector<2x8xf32>
    %203 = vector.multi_reduction <add>, %202, %cst_86 [2] : vector<2x8x8xf32> to vector<2x8xf32>
    %204 = vector.shape_cast %203 : vector<2x8xf32> to vector<2x8x1xf32>
    %205 = tpu.reciprocal %204 {approx = true} : vector<2x8x1xf32> -> vector<2x8x1xf32>
    %206 = vector.broadcast %205 : vector<2x8x1xf32> to vector<2x8x8xf32>
    %207 = arith.mulf %202, %206 : vector<2x8x8xf32>
    %208 = arith.truncf %207 : vector<2x8x8xf32> to vector<2x8x8xbf16>
    "tpu.trace_start"() <{level = 10 : i32, message = "bqk,bkd->bqd"}> : () -> ()
    %cst_87 = arith.constant dense<0.000000e+00> : vector<2x8x8xf32>
    %209 = tpu.matmul %208, %196, %cst_87 {dimension_numbers = #tpu.dot_dimension_numbers<[2], [1], [1], [2], [0, 0, 0, 1, 1, 2], [0], [0]>} : vector<2x8x8xbf16>, vector<2x8x8xbf16>, vector<2x8x8xf32> -> vector<2x8x8xf32>
    "tpu.trace_stop"() : () -> ()
    %210 = vector.extract_strided_slice %177 {offsets = [0, 0, 16], sizes = [2, 8, 8], strides = [1, 1, 1]} : vector<2x8x128xbf16> to vector<2x8x8xbf16>
    %211 = vector.extract_strided_slice %177 {offsets = [0, 0, 48], sizes = [2, 8, 8], strides = [1, 1, 1]} : vector<2x8x128xbf16> to vector<2x8x8xbf16>
    %212 = vector.extract_strided_slice %177 {offsets = [0, 0, 80], sizes = [2, 8, 8], strides = [1, 1, 1]} : vector<2x8x128xbf16> to vector<2x8x8xbf16>
    "tpu.trace_start"() <{level = 10 : i32, message = "bqd,bkd->bqk"}> : () -> ()
    %cst_88 = arith.constant dense<0.000000e+00> : vector<2x8x8xf32>
    %213 = tpu.matmul %210, %211, %cst_88 {dimension_numbers = #tpu.dot_dimension_numbers<[2], [2], [1], [1], [0, 0, 0, 1, 1, 1], [0], [0]>} : vector<2x8x8xbf16>, vector<2x8x8xbf16>, vector<2x8x8xf32> -> vector<2x8x8xf32>
    "tpu.trace_stop"() : () -> ()
    %cst_89 = arith.constant dense<0xFF800000> : vector<2x8xf32>
    %214 = vector.multi_reduction <maximumf>, %213, %cst_89 [2] : vector<2x8x8xf32> to vector<2x8xf32>
    %215 = vector.shape_cast %214 : vector<2x8xf32> to vector<2x8x1xf32>
    %216 = vector.broadcast %215 : vector<2x8x1xf32> to vector<2x8x8xf32>
    %217 = arith.subf %213, %216 : vector<2x8x8xf32>
    %218 = math.exp %217 : vector<2x8x8xf32>
    %cst_90 = arith.constant dense<0.000000e+00> : vector<2x8xf32>
    %219 = vector.multi_reduction <add>, %218, %cst_90 [2] : vector<2x8x8xf32> to vector<2x8xf32>
    %220 = vector.shape_cast %219 : vector<2x8xf32> to vector<2x8x1xf32>
    %221 = tpu.reciprocal %220 {approx = true} : vector<2x8x1xf32> -> vector<2x8x1xf32>
    %222 = vector.broadcast %221 : vector<2x8x1xf32> to vector<2x8x8xf32>
    %223 = arith.mulf %218, %222 : vector<2x8x8xf32>
    %224 = arith.truncf %223 : vector<2x8x8xf32> to vector<2x8x8xbf16>
    "tpu.trace_start"() <{level = 10 : i32, message = "bqk,bkd->bqd"}> : () -> ()
    %cst_91 = arith.constant dense<0.000000e+00> : vector<2x8x8xf32>
    %225 = tpu.matmul %224, %212, %cst_91 {dimension_numbers = #tpu.dot_dimension_numbers<[2], [1], [1], [2], [0, 0, 0, 1, 1, 2], [0], [0]>} : vector<2x8x8xbf16>, vector<2x8x8xbf16>, vector<2x8x8xf32> -> vector<2x8x8xf32>
    "tpu.trace_stop"() : () -> ()
    %226 = vector.extract_strided_slice %177 {offsets = [0, 0, 24], sizes = [2, 8, 8], strides = [1, 1, 1]} : vector<2x8x128xbf16> to vector<2x8x8xbf16>
    %227 = vector.extract_strided_slice %177 {offsets = [0, 0, 56], sizes = [2, 8, 8], strides = [1, 1, 1]} : vector<2x8x128xbf16> to vector<2x8x8xbf16>
    %228 = vector.extract_strided_slice %177 {offsets = [0, 0, 88], sizes = [2, 8, 8], strides = [1, 1, 1]} : vector<2x8x128xbf16> to vector<2x8x8xbf16>
    "tpu.trace_start"() <{level = 10 : i32, message = "bqd,bkd->bqk"}> : () -> ()
    %cst_92 = arith.constant dense<0.000000e+00> : vector<2x8x8xf32>
    %229 = tpu.matmul %226, %227, %cst_92 {dimension_numbers = #tpu.dot_dimension_numbers<[2], [2], [1], [1], [0, 0, 0, 1, 1, 1], [0], [0]>} : vector<2x8x8xbf16>, vector<2x8x8xbf16>, vector<2x8x8xf32> -> vector<2x8x8xf32>
    "tpu.trace_stop"() : () -> ()
    %cst_93 = arith.constant dense<0xFF800000> : vector<2x8xf32>
    %230 = vector.multi_reduction <maximumf>, %229, %cst_93 [2] : vector<2x8x8xf32> to vector<2x8xf32>
    %231 = vector.shape_cast %230 : vector<2x8xf32> to vector<2x8x1xf32>
    %232 = vector.broadcast %231 : vector<2x8x1xf32> to vector<2x8x8xf32>
    %233 = arith.subf %229, %232 : vector<2x8x8xf32>
    %234 = math.exp %233 : vector<2x8x8xf32>
    %cst_94 = arith.constant dense<0.000000e+00> : vector<2x8xf32>
    %235 = vector.multi_reduction <add>, %234, %cst_94 [2] : vector<2x8x8xf32> to vector<2x8xf32>
    %236 = vector.shape_cast %235 : vector<2x8xf32> to vector<2x8x1xf32>
    %237 = tpu.reciprocal %236 {approx = true} : vector<2x8x1xf32> -> vector<2x8x1xf32>
    %238 = vector.broadcast %237 : vector<2x8x1xf32> to vector<2x8x8xf32>
    %239 = arith.mulf %234, %238 : vector<2x8x8xf32>
    %240 = arith.truncf %239 : vector<2x8x8xf32> to vector<2x8x8xbf16>
    "tpu.trace_start"() <{level = 10 : i32, message = "bqk,bkd->bqd"}> : () -> ()
    %cst_95 = arith.constant dense<0.000000e+00> : vector<2x8x8xf32>
    %241 = tpu.matmul %240, %228, %cst_95 {dimension_numbers = #tpu.dot_dimension_numbers<[2], [1], [1], [2], [0, 0, 0, 1, 1, 2], [0], [0]>} : vector<2x8x8xbf16>, vector<2x8x8xbf16>, vector<2x8x8xf32> -> vector<2x8x8xf32>
    "tpu.trace_stop"() : () -> ()
    %242 = tpu.concatenate %193, %209, %225, %241 in 2 : vector<2x8x8xf32>, vector<2x8x8xf32>, vector<2x8x8xf32>, vector<2x8x8xf32> -> vector<2x8x32xf32>
    %243 = vector.shape_cast %242 : vector<2x8x32xf32> to vector<16x32xf32>
    %244 = arith.truncf %243 : vector<16x32xf32> to vector<16x32xbf16>
    %c1_96 = arith.constant 1 : index
    %c0_97 = arith.constant 0 : index
    %c0_98 = arith.constant 0 : index
    %245 = vector.load %arg7[%c1_96, %c0_97, %c0_98] : memref<2x32x128xbf16, #tpu.memory_space<vmem>>, vector<1x32x128xbf16>
    %246 = vector.shape_cast %245 : vector<1x32x128xbf16> to vector<32x128xbf16>
    %cst_99 = arith.constant dense<0.000000e+00> : vector<16x128xf32>
    %247 = tpu.matmul %244, %246, %cst_99 {dimension_numbers = #tpu.dot_dimension_numbers<[1], [0], [0], [1], [0, 0, 1, 1], [], []>} : vector<16x32xbf16>, vector<32x128xbf16>, vector<16x128xf32> -> vector<16x128xf32>
    %c1_100 = arith.constant 1 : index
    %c0_101 = arith.constant 0 : index
    %c0_102 = arith.constant 0 : index
    %248 = vector.load %arg8[%c1_100, %c0_101, %c0_102] : memref<2x1x128xf32, #tpu.memory_space<vmem>>, vector<1x1x128xf32>
    %249 = vector.shape_cast %248 : vector<1x1x128xf32> to vector<1x128xf32>
    %250 = vector.broadcast %249 : vector<1x128xf32> to vector<16x128xf32>
    %251 = arith.addf %247, %250 : vector<16x128xf32>
    %252 = arith.addf %167, %251 : vector<16x128xf32>
    %c1_103 = arith.constant 1 : index
    %c0_104 = arith.constant 0 : index
    %c0_105 = arith.constant 0 : index
    %253 = vector.load %arg13[%c1_103, %c0_104, %c0_105] : memref<2x1x128xf32, #tpu.memory_space<vmem>>, vector<1x1x128xf32>
    %254 = vector.shape_cast %253 : vector<1x1x128xf32> to vector<1x128xf32>
    %c1_106 = arith.constant 1 : index
    %c0_107 = arith.constant 0 : index
    %c0_108 = arith.constant 0 : index
    %255 = vector.load %arg14[%c1_106, %c0_107, %c0_108] : memref<2x1x128xf32, #tpu.memory_space<vmem>>, vector<1x1x128xf32>
    %256 = vector.shape_cast %255 : vector<1x1x128xf32> to vector<1x128xf32>
    %cst_109 = arith.constant dense<0.000000e+00> : vector<16xf32>
    %257 = vector.multi_reduction <add>, %252, %cst_109 [1] : vector<16x128xf32> to vector<16xf32>
    %258 = vector.shape_cast %257 : vector<16xf32> to vector<16x1xf32>
    %cst_110 = arith.constant 3.125000e-02 : f32
    %259 = vector.broadcast %cst_110 : f32 to vector<16x1xf32>
    %260 = arith.mulf %258, %259 : vector<16x1xf32>
    %261 = arith.mulf %252, %252 : vector<16x128xf32>
    %cst_111 = arith.constant dense<0.000000e+00> : vector<16xf32>
    %262 = vector.multi_reduction <add>, %261, %cst_111 [1] : vector<16x128xf32> to vector<16xf32>
    %263 = vector.shape_cast %262 : vector<16xf32> to vector<16x1xf32>
    %cst_112 = arith.constant 3.125000e-02 : f32
    %264 = vector.broadcast %cst_112 : f32 to vector<16x1xf32>
    %265 = arith.mulf %263, %264 : vector<16x1xf32>
    %266 = arith.mulf %260, %260 : vector<16x1xf32>
    %267 = arith.subf %265, %266 : vector<16x1xf32>
    %268 = vector.broadcast %260 : vector<16x1xf32> to vector<16x128xf32>
    %269 = arith.subf %252, %268 : vector<16x128xf32>
    %cst_113 = arith.constant 9.99999974E-6 : f32
    %270 = vector.broadcast %cst_113 : f32 to vector<16x1xf32>
    %271 = arith.addf %267, %270 : vector<16x1xf32>
    %272 = math.rsqrt %271 : vector<16x1xf32>
    %273 = vector.broadcast %272 : vector<16x1xf32> to vector<16x128xf32>
    %274 = arith.mulf %269, %273 : vector<16x128xf32>
    %275 = vector.broadcast %254 : vector<1x128xf32> to vector<16x128xf32>
    %276 = arith.mulf %274, %275 : vector<16x128xf32>
    %277 = vector.broadcast %256 : vector<1x128xf32> to vector<16x128xf32>
    %278 = arith.addf %276, %277 : vector<16x128xf32>
    %279 = arith.truncf %278 : vector<16x128xf32> to vector<16x128xbf16>
    %c1_114 = arith.constant 1 : index
    %c0_115 = arith.constant 0 : index
    %c0_116 = arith.constant 0 : index
    %280 = vector.load %arg9[%c1_114, %c0_115, %c0_116] : memref<2x128x128xbf16, #tpu.memory_space<vmem>>, vector<1x128x128xbf16>
    %281 = vector.shape_cast %280 : vector<1x128x128xbf16> to vector<128x128xbf16>
    %cst_117 = arith.constant dense<0.000000e+00> : vector<16x128xf32>
    %282 = tpu.matmul %279, %281, %cst_117 {dimension_numbers = #tpu.dot_dimension_numbers<[1], [0], [0], [1], [0, 0, 1, 1], [], []>} : vector<16x128xbf16>, vector<128x128xbf16>, vector<16x128xf32> -> vector<16x128xf32>
    %c1_118 = arith.constant 1 : index
    %c0_119 = arith.constant 0 : index
    %c0_120 = arith.constant 0 : index
    %283 = vector.load %arg10[%c1_118, %c0_119, %c0_120] : memref<2x1x128xf32, #tpu.memory_space<vmem>>, vector<1x1x128xf32>
    %284 = vector.shape_cast %283 : vector<1x1x128xf32> to vector<1x128xf32>
    %285 = vector.broadcast %284 : vector<1x128xf32> to vector<16x128xf32>
    %286 = arith.addf %282, %285 : vector<16x128xf32>
    %cst_121 = arith.constant 0.000000e+00 : f32
    %287 = vector.broadcast %cst_121 : f32 to vector<16x128xf32>
    %288 = arith.maximumf %286, %287 : vector<16x128xf32>
    %289 = arith.truncf %288 : vector<16x128xf32> to vector<16x128xbf16>
    %c1_122 = arith.constant 1 : index
    %c0_123 = arith.constant 0 : index
    %c0_124 = arith.constant 0 : index
    %290 = vector.load %arg11[%c1_122, %c0_123, %c0_124] : memref<2x128x128xbf16, #tpu.memory_space<vmem>>, vector<1x128x128xbf16>
    %291 = vector.shape_cast %290 : vector<1x128x128xbf16> to vector<128x128xbf16>
    %cst_125 = arith.constant dense<0.000000e+00> : vector<16x128xf32>
    %292 = tpu.matmul %289, %291, %cst_125 {dimension_numbers = #tpu.dot_dimension_numbers<[1], [0], [0], [1], [0, 0, 1, 1], [], []>} : vector<16x128xbf16>, vector<128x128xbf16>, vector<16x128xf32> -> vector<16x128xf32>
    %c1_126 = arith.constant 1 : index
    %c0_127 = arith.constant 0 : index
    %c0_128 = arith.constant 0 : index
    %293 = vector.load %arg12[%c1_126, %c0_127, %c0_128] : memref<2x1x128xf32, #tpu.memory_space<vmem>>, vector<1x1x128xf32>
    %294 = vector.shape_cast %293 : vector<1x1x128xf32> to vector<1x128xf32>
    %295 = vector.broadcast %294 : vector<1x128xf32> to vector<16x128xf32>
    %296 = arith.addf %292, %295 : vector<16x128xf32>
    %297 = arith.addf %278, %296 : vector<16x128xf32>
    %c1_129 = arith.constant 1 : index
    %c0_130 = arith.constant 0 : index
    %c0_131 = arith.constant 0 : index
    %298 = vector.load %arg15[%c1_129, %c0_130, %c0_131] : memref<2x1x128xf32, #tpu.memory_space<vmem>>, vector<1x1x128xf32>
    %299 = vector.shape_cast %298 : vector<1x1x128xf32> to vector<1x128xf32>
    %c1_132 = arith.constant 1 : index
    %c0_133 = arith.constant 0 : index
    %c0_134 = arith.constant 0 : index
    %300 = vector.load %arg16[%c1_132, %c0_133, %c0_134] : memref<2x1x128xf32, #tpu.memory_space<vmem>>, vector<1x1x128xf32>
    %301 = vector.shape_cast %300 : vector<1x1x128xf32> to vector<1x128xf32>
    %cst_135 = arith.constant dense<0.000000e+00> : vector<16xf32>
    %302 = vector.multi_reduction <add>, %297, %cst_135 [1] : vector<16x128xf32> to vector<16xf32>
    %303 = vector.shape_cast %302 : vector<16xf32> to vector<16x1xf32>
    %cst_136 = arith.constant 3.125000e-02 : f32
    %304 = vector.broadcast %cst_136 : f32 to vector<16x1xf32>
    %305 = arith.mulf %303, %304 : vector<16x1xf32>
    %306 = arith.mulf %297, %297 : vector<16x128xf32>
    %cst_137 = arith.constant dense<0.000000e+00> : vector<16xf32>
    %307 = vector.multi_reduction <add>, %306, %cst_137 [1] : vector<16x128xf32> to vector<16xf32>
    %308 = vector.shape_cast %307 : vector<16xf32> to vector<16x1xf32>
    %cst_138 = arith.constant 3.125000e-02 : f32
    %309 = vector.broadcast %cst_138 : f32 to vector<16x1xf32>
    %310 = arith.mulf %308, %309 : vector<16x1xf32>
    %311 = arith.mulf %305, %305 : vector<16x1xf32>
    %312 = arith.subf %310, %311 : vector<16x1xf32>
    %313 = vector.broadcast %305 : vector<16x1xf32> to vector<16x128xf32>
    %314 = arith.subf %297, %313 : vector<16x128xf32>
    %cst_139 = arith.constant 9.99999974E-6 : f32
    %315 = vector.broadcast %cst_139 : f32 to vector<16x1xf32>
    %316 = arith.addf %312, %315 : vector<16x1xf32>
    %317 = math.rsqrt %316 : vector<16x1xf32>
    %318 = vector.broadcast %317 : vector<16x1xf32> to vector<16x128xf32>
    %319 = arith.mulf %314, %318 : vector<16x128xf32>
    %320 = vector.broadcast %299 : vector<1x128xf32> to vector<16x128xf32>
    %321 = arith.mulf %319, %320 : vector<16x128xf32>
    %322 = vector.broadcast %301 : vector<1x128xf32> to vector<16x128xf32>
    %323 = arith.addf %321, %322 : vector<16x128xf32>
    %324 = vector.shape_cast %323 : vector<16x128xf32> to vector<2x8x128xf32>
    %cst_140 = arith.constant dense<0.000000e+00> : vector<8x128xf32>
    %325 = vector.multi_reduction <add>, %324, %cst_140 [0] : vector<2x8x128xf32> to vector<8x128xf32>
    %cst_141 = arith.constant 2.000000e+00 : f32
    %326 = vector.broadcast %cst_141 : f32 to vector<8x128xf32>
    %327 = arith.divf %325, %326 : vector<8x128xf32>
    %328 = arith.truncf %327 : vector<8x128xf32> to vector<8x128xbf16>
    %c0_142 = arith.constant 0 : index
    %c0_143 = arith.constant 0 : index
    %329 = vector.load %arg17[%c0_142, %c0_143] : memref<128x128xbf16, #tpu.memory_space<vmem>>, vector<128x128xbf16>
    %cst_144 = arith.constant dense<0.000000e+00> : vector<8x128xf32>
    %330 = tpu.matmul %328, %329, %cst_144 {dimension_numbers = #tpu.dot_dimension_numbers<[1], [0], [0], [1], [0, 0, 1, 1], [], []>} : vector<8x128xbf16>, vector<128x128xbf16>, vector<8x128xf32> -> vector<8x128xf32>
    %c0_145 = arith.constant 0 : index
    %c0_146 = arith.constant 0 : index
    %331 = vector.load %arg18[%c0_145, %c0_146] : memref<1x128xf32, #tpu.memory_space<vmem>>, vector<1x128xf32>
    %332 = vector.broadcast %331 : vector<1x128xf32> to vector<8x128xf32>
    %333 = arith.addf %330, %332 : vector<8x128xf32>
    %c0_147 = arith.constant 0 : index
    %c0_148 = arith.constant 0 : index
    %334 = vector.load %arg19[%c0_147, %c0_148] : memref<8x128xf32, #tpu.memory_space<vmem>>, vector<8x128xf32>
    tpu.vector_store %arg19[%c0_147, %c0_148], %333 {strides = array<i32>} : memref<8x128xf32, #tpu.memory_space<vmem>>, vector<8x128xf32>,
    return
  }
  func.func @transform_0(%arg0: i32) -> (i32, i32) {
    %c0_i32 = arith.constant 0 : i32
    %c0_i32_0 = arith.constant 0 : i32
    %c0_i32_1 = arith.constant 0 : i32
    return %c0_i32, %c0_i32_0 : i32, i32
  }
  func.func @transform_1(%arg0: i32) -> (i32, i32) {
    %c0_i32 = arith.constant 0 : i32
    %c0_i32_0 = arith.constant 0 : i32
    %c0_i32_1 = arith.constant 0 : i32
    return %c0_i32, %c0_i32_0 : i32, i32
  }
  func.func @transform_2(%arg0: i32) -> (i32, i32) {
    %c0_i32 = arith.constant 0 : i32
    %c0_i32_0 = arith.constant 0 : i32
    %c0_i32_1 = arith.constant 0 : i32
    return %c0_i32, %c0_i32_0 : i32, i32
  }
  func.func @transform_3(%arg0: i32) -> (i32, i32) {
    %c0_i32 = arith.constant 0 : i32
    %c0_i32_0 = arith.constant 0 : i32
    %c0_i32_1 = arith.constant 0 : i32
    return %c0_i32, %c0_i32_0 : i32, i32
  }
  func.func @transform_4(%arg0: i32) -> (i32, i32, i32) {
    %c0_i32 = arith.constant 0 : i32
    %c0_i32_0 = arith.constant 0 : i32
    %c0_i32_1 = arith.constant 0 : i32
    %c0_i32_2 = arith.constant 0 : i32
    return %c0_i32, %c0_i32_0, %c0_i32_1 : i32, i32, i32
  }
  func.func @transform_5(%arg0: i32) -> (i32, i32, i32) {
    %c0_i32 = arith.constant 0 : i32
    %c0_i32_0 = arith.constant 0 : i32
    %c0_i32_1 = arith.constant 0 : i32
    %c0_i32_2 = arith.constant 0 : i32
    return %c0_i32, %c0_i32_0, %c0_i32_1 : i32, i32, i32
  }
  func.func @transform_6(%arg0: i32) -> (i32, i32, i32) {
    %c0_i32 = arith.constant 0 : i32
    %c0_i32_0 = arith.constant 0 : i32
    %c0_i32_1 = arith.constant 0 : i32
    %c0_i32_2 = arith.constant 0 : i32
    return %c0_i32, %c0_i32_0, %c0_i32_1 : i32, i32, i32
  }
  func.func @transform_7(%arg0: i32) -> (i32, i32, i32) {
    %c0_i32 = arith.constant 0 : i32
    %c0_i32_0 = arith.constant 0 : i32
    %c0_i32_1 = arith.constant 0 : i32
    %c0_i32_2 = arith.constant 0 : i32
    return %c0_i32, %c0_i32_0, %c0_i32_1 : i32, i32, i32
  }
  func.func @transform_8(%arg0: i32) -> (i32, i32, i32) {
    %c0_i32 = arith.constant 0 : i32
    %c0_i32_0 = arith.constant 0 : i32
    %c0_i32_1 = arith.constant 0 : i32
    %c0_i32_2 = arith.constant 0 : i32
    return %c0_i32, %c0_i32_0, %c0_i32_1 : i32, i32, i32
  }
  func.func @transform_9(%arg0: i32) -> (i32, i32, i32) {
    %c0_i32 = arith.constant 0 : i32
    %c0_i32_0 = arith.constant 0 : i32
    %c0_i32_1 = arith.constant 0 : i32
    %c0_i32_2 = arith.constant 0 : i32
    return %c0_i32, %c0_i32_0, %c0_i32_1 : i32, i32, i32
  }
  func.func @transform_10(%arg0: i32) -> (i32, i32, i32) {
    %c0_i32 = arith.constant 0 : i32
    %c0_i32_0 = arith.constant 0 : i32
    %c0_i32_1 = arith.constant 0 : i32
    %c0_i32_2 = arith.constant 0 : i32
    return %c0_i32, %c0_i32_0, %c0_i32_1 : i32, i32, i32
  }
  func.func @transform_11(%arg0: i32) -> (i32, i32, i32) {
    %c0_i32 = arith.constant 0 : i32
    %c0_i32_0 = arith.constant 0 : i32
    %c0_i32_1 = arith.constant 0 : i32
    %c0_i32_2 = arith.constant 0 : i32
    return %c0_i32, %c0_i32_0, %c0_i32_1 : i32, i32, i32
  }
  func.func @transform_12(%arg0: i32) -> (i32, i32, i32) {
    %c0_i32 = arith.constant 0 : i32
    %c0_i32_0 = arith.constant 0 : i32
    %c0_i32_1 = arith.constant 0 : i32
    %c0_i32_2 = arith.constant 0 : i32
    return %c0_i32, %c0_i32_0, %c0_i32_1 : i32, i32, i32
  }
  func.func @transform_13(%arg0: i32) -> (i32, i32, i32) {
    %c0_i32 = arith.constant 0 : i32
    %c0_i32_0 = arith.constant 0 : i32
    %c0_i32_1 = arith.constant 0 : i32
    %c0_i32_2 = arith.constant 0 : i32
    return %c0_i32, %c0_i32_0, %c0_i32_1 : i32, i32, i32
  }
  func.func @transform_14(%arg0: i32) -> (i32, i32, i32) {
    %c0_i32 = arith.constant 0 : i32
    %c0_i32_0 = arith.constant 0 : i32
    %c0_i32_1 = arith.constant 0 : i32
    %c0_i32_2 = arith.constant 0 : i32
    return %c0_i32, %c0_i32_0, %c0_i32_1 : i32, i32, i32
  }
  func.func @transform_15(%arg0: i32) -> (i32, i32, i32) {
    %c0_i32 = arith.constant 0 : i32
    %c0_i32_0 = arith.constant 0 : i32
    %c0_i32_1 = arith.constant 0 : i32
    %c0_i32_2 = arith.constant 0 : i32
    return %c0_i32, %c0_i32_0, %c0_i32_1 : i32, i32, i32
  }
  func.func @transform_16(%arg0: i32) -> (i32, i32) {
    %c0_i32 = arith.constant 0 : i32
    %c0_i32_0 = arith.constant 0 : i32
    %c0_i32_1 = arith.constant 0 : i32
    return %c0_i32, %c0_i32_0 : i32, i32
  }
  func.func @transform_17(%arg0: i32) -> (i32, i32) {
    %c0_i32 = arith.constant 0 : i32
    %c0_i32_0 = arith.constant 0 : i32
    %c0_i32_1 = arith.constant 0 : i32
    return %c0_i32, %c0_i32_0 : i32, i32
  }
  func.func @transform_18(%arg0: i32) -> (i32, i32) {
    %c0_i32 = arith.constant 0 : i32
    %c0_i32_0 = arith.constant 0 : i32
    %c0_i32_1 = arith.constant 0 : i32
    return %c0_i32, %c0_i32_0 : i32, i32
  }
}

</mosaic_0001>

<llo_original>
// kernel: tpu_custom_call.1
$region0: #{tpu_custom_call.1}
  #allocation0 [shape = 'u32[]', space=smem, size = 0x4, offset = 0x4, fixed_abs, tag = 'smem constant byte address 0x4 - core index']
  #allocation1 [shape = 'u32[72,128]{1,0:T(1,128)}', space=vmem, size = 0x9000, scoped, tag = 'internal scratch']
  %s0 = inlined_call_operand.hbm [shape: bf16[16,16], index: 0, kind: input, shape index: {}]
  %s1 = inlined_call_operand.hbm [shape: f32[8,128], index: 1, kind: input, shape index: {}]
  %s2 = inlined_call_operand.hbm [shape: bf16[16,128], index: 2, kind: input, shape index: {}]
  %s3 = inlined_call_operand.hbm [shape: f32[1,128], index: 3, kind: input, shape index: {}]
  %s4 = inlined_call_operand.hbm [shape: bf16[2,128,128], index: 4, kind: input, shape index: {}]
  %s5 = inlined_call_operand.vmem [shape: f32[2,1,128], index: 5, kind: input, shape index: {}]
  %s6 = inlined_call_operand.hbm [shape: bf16[2,32,128], index: 6, kind: input, shape index: {}]
  %s7 = inlined_call_operand.vmem [shape: f32[2,1,128], index: 7, kind: input, shape index: {}]
  %s8 = inlined_call_operand.hbm [shape: bf16[2,128,128], index: 8, kind: input, shape index: {}]
  %s9 = inlined_call_operand.vmem [shape: f32[2,1,128], index: 9, kind: input, shape index: {}]
  %s10 = inlined_call_operand.hbm [shape: bf16[2,128,128], index: 10, kind: input, shape index: {}]
  %s11 = inlined_call_operand.vmem [shape: f32[2,1,128], index: 11, kind: input, shape index: {}]
  %s12 = inlined_call_operand.vmem [shape: f32[2,1,128], index: 12, kind: input, shape index: {}]
  %s13 = inlined_call_operand.vmem [shape: f32[2,1,128], index: 13, kind: input, shape index: {}]
  %s14 = inlined_call_operand.hbm [shape: f32[2,1,128], index: 14, kind: input, shape index: {}]
  %s15 = inlined_call_operand.vmem [shape: f32[2,1,128], index: 15, kind: input, shape index: {}]
  %s16 = inlined_call_operand.hbm [shape: bf16[128,128], index: 16, kind: input, shape index: {}]
  %s17 = inlined_call_operand.vmem [shape: f32[1,128], index: 17, kind: input, shape index: {}]
  %s18 = inlined_call_operand.hbm [shape: f32[8,128], index: 18, kind: output, shape index: {}]
  %s19 = sld [smem:[#allocation0]]
  $region122: #{tpu_custom_call.1} parent=0
    _
  %s21 = ssub.s32 1, %s19
  %s22 = scalar_select 0, %s21, %s19
  $region1: #{tpu_custom_call.1} parent=0
    #allocation2 [shape = 'u8[4096]{0}', space=vmem, size = 0x1000, scoped, tag = 'input window, operand 0, single buffered']
    #allocation3 [shape = 's32[1]{0}', space=sflag, size = 0x4, scoped, tag = 'scoped memory for tpu_custom_call.1']
    #allocation4 [shape = 's32[1]{0}', space=sflag, size = 0x4, scoped, tag = 'scoped memory for tpu_custom_call.1']
    #allocation5 [shape = 'u8[4096]{0}', space=vmem, size = 0x1000, scoped, tag = 'input window, operand 1, single buffered']
    #allocation6 [shape = 's32[1]{0}', space=sflag, size = 0x4, scoped, tag = 'scoped memory for tpu_custom_call.1']
    #allocation7 [shape = 'u8[4096]{0}', space=vmem, size = 0x1000, scoped, tag = 'input window, operand 2, single buffered']
    #allocation8 [shape = 'u8[512]{0}', space=vmem, size = 0x400, scoped, tag = 'input window, operand 3, single buffered']
    #allocation9 [shape = 's32[1]{0}', space=sflag, size = 0x4, scoped, tag = 'scoped memory for tpu_custom_call.1']
    #allocation10 [shape = 'u8[65536]{0}', space=vmem, size = 0x10000, scoped, tag = 'input window, operand 4, single buffered']
    #allocation11 [shape = 'u8[16384]{0}', space=vmem, size = 0x4000, scoped, tag = 'input window, operand 6, single buffered']
    #allocation12 [shape = 's32[1]{0}', space=sflag, size = 0x4, scoped, tag = 'scoped memory for tpu_custom_call.1']
    #allocation13 [shape = 'u8[65536]{0}', space=vmem, size = 0x10000, scoped, tag = 'input window, operand 8, single buffered']
    #allocation14 [shape = 'u8[65536]{0}', space=vmem, size = 0x10000, scoped, tag = 'input window, operand 10, single buffered']
    #allocation15 [shape = 's32[1]{0}', space=sflag, size = 0x4, scoped, tag = 'scoped memory for tpu_custom_call.1']
    #allocation16 [shape = 'u8[1024]{0}', space=vmem, size = 0x400, scoped, tag = 'input window, operand 14, single buffered']
    #allocation17 [shape = 'u8[32768]{0}', space=vmem, size = 0x8000, scoped, tag = 'input window, operand 16, single buffered']
    #allocation18 [shape = 's32[1]{0}', space=sflag, size = 0x4, scoped, tag = 'scoped memory for tpu_custom_call.1']
    #allocation19 [shape = 'u8[4096]{0}', space=vmem, size = 0x1000, scoped, tag = 'output window, operand 0, single buffered']
    %23 = vsyncpa [#allocation3], 0
    %24 = vsyncpa [#allocation6], 0
    %25 = vsyncpa [#allocation9], 0
    %26 = vsyncpa [#allocation12], 0
    %27 = vsyncpa [#allocation15], 0
    %28 = vsyncpa [#allocation18], 0
    %29 = vsyncpa [#allocation4], 0
    // Predicated region
    $region2: #{tpu_custom_call.1} parent=1 // pred_check
      _
    $region3: #{tpu_custom_call.1} parent=1 // pred_check_branch
      %31 = sbr.rel (0) target = $region5
    $region4: #{tpu_custom_call.1} parent=1 // pred_region
      %33 = vsyncadd [#allocation3], 0
      %s34 = sshll.u32 %s0, 4
      %s35 = int_to_ptr.hbm [resolvable:$true] %s34
      %s36 = sshll.u32 [#allocation2], 4
      %s37 = int_to_ptr.vmem [resolvable:$true] %s36
      %42 = dma.hbm_to_vmem [thread:$0]  %s35, 128, %s37, [#allocation3], 64, 64, 4
    $region5: #{tpu_custom_call.1} parent=1 // pred_fallthru
      _
    // Predicated region
    $region6: #{tpu_custom_call.1} parent=1 // pred_check
      _
    $region7: #{tpu_custom_call.1} parent=1 // pred_check_branch
      %44 = sbr.rel (0) target = $region9
    $region8: #{tpu_custom_call.1} parent=1 // pred_region
      %46 = vsyncadd [#allocation6], 0
      %s48 = sshll.u32 %s1, 4
      %s49 = int_to_ptr.hbm [resolvable:$true] %s48
      %s50 = sshll.u32 [#allocation5], 4
      %s51 = int_to_ptr.vmem [resolvable:$true] %s50
      %53 = dma.hbm_to_vmem [thread:$0]  %s49, 128, %s51, [#allocation6]
    $region9: #{tpu_custom_call.1} parent=1 // pred_fallthru
      _
    // Predicated region
    $region10: #{tpu_custom_call.1} parent=1 // pred_check
      _
    $region11: #{tpu_custom_call.1} parent=1 // pred_check_branch
      %55 = sbr.rel (0) target = $region13
    $region12: #{tpu_custom_call.1} parent=1 // pred_region
      %57 = vsyncadd [#allocation6], 0
      %s58 = sshll.u32 %s2, 4
      %s59 = int_to_ptr.hbm [resolvable:$true] %s58
      %s60 = sshll.u32 [#allocation7], 4
      %s61 = int_to_ptr.vmem [resolvable:$true] %s60
      %66 = dma.hbm_to_vmem [thread:$0]  %s59, 128, %s61, [#allocation6], 64, 64, 4
    $region13: #{tpu_custom_call.1} parent=1 // pred_fallthru
      _
    // Predicated region
    $region14: #{tpu_custom_call.1} parent=1 // pred_check
      _
    $region15: #{tpu_custom_call.1} parent=1 // pred_check_branch
      %68 = sbr.rel (0) target = $region17
    $region16: #{tpu_custom_call.1} parent=1 // pred_region
      %70 = vsyncadd [#allocation9], 0
      %s72 = sshll.u32 %s3, 4
      %s73 = int_to_ptr.hbm [resolvable:$true] %s72
      %s74 = sshll.u32 [#allocation8], 4
      %s75 = int_to_ptr.vmem [resolvable:$true] %s74
      %77 = dma.hbm_to_vmem [thread:$0]  %s73, 16, %s75, [#allocation9]
    $region17: #{tpu_custom_call.1} parent=1 // pred_fallthru
      _
    // Predicated region
    $region18: #{tpu_custom_call.1} parent=1 // pred_check
      _
    $region19: #{tpu_custom_call.1} parent=1 // pred_check_branch
      %79 = sbr.rel (0) target = $region21
    $region20: #{tpu_custom_call.1} parent=1 // pred_region
      %81 = vsyncadd [#allocation9], 0
      %s82 = sshll.u32 %s4, 4
      %s83 = int_to_ptr.hbm [resolvable:$true] %s82
      %s84 = sshll.u32 [#allocation10], 4
      %s85 = int_to_ptr.vmem [resolvable:$true] %s84
      %90 = dma.hbm_to_vmem [thread:$0]  %s83, 2048, %s85, [#allocation9], 64, 64, 4
    $region21: #{tpu_custom_call.1} parent=1 // pred_fallthru
      _
    // Predicated region
    $region22: #{tpu_custom_call.1} parent=1 // pred_check
      _
    $region23: #{tpu_custom_call.1} parent=1 // pred_check_branch
      %92 = sbr.rel (0) target = $region25
    $region24: #{tpu_custom_call.1} parent=1 // pred_region
      _
    $region25: #{tpu_custom_call.1} parent=1 // pred_fallthru
      _
    // Predicated region
    $region26: #{tpu_custom_call.1} parent=1 // pred_check
      _
    $region27: #{tpu_custom_call.1} parent=1 // pred_check_branch
      %94 = sbr.rel (0) target = $region29
    $region28: #{tpu_custom_call.1} parent=1 // pred_region
      %96 = vsyncadd [#allocation12], 0
      %s97 = sshll.u32 %s6, 4
      %s98 = int_to_ptr.hbm [resolvable:$true] %s97
      %s99 = sshll.u32 [#allocation11], 4
      %s100 = int_to_ptr.vmem [resolvable:$true] %s99
      %105 = dma.hbm_to_vmem [thread:$0]  %s98, 512, %s100, [#allocation12], 64, 64, 4
    $region29: #{tpu_custom_call.1} parent=1 // pred_fallthru
      _
    // Predicated region
    $region30: #{tpu_custom_call.1} parent=1 // pred_check
      _
    $region31: #{tpu_custom_call.1} parent=1 // pred_check_branch
      %107 = sbr.rel (0) target = $region33
    $region32: #{tpu_custom_call.1} parent=1 // pred_region
      _
    $region33: #{tpu_custom_call.1} parent=1 // pred_fallthru
      _
    // Predicated region
    $region34: #{tpu_custom_call.1} parent=1 // pred_check
      _
    $region35: #{tpu_custom_call.1} parent=1 // pred_check_branch
      %109 = sbr.rel (0) target = $region37
    $region36: #{tpu_custom_call.1} parent=1 // pred_region
      %111 = vsyncadd [#allocation12], 0
      %s112 = sshll.u32 %s8, 4
      %s113 = int_to_ptr.hbm [resolvable:$true] %s112
      %s114 = sshll.u32 [#allocation13], 4
      %s115 = int_to_ptr.vmem [resolvable:$true] %s114
      %120 = dma.hbm_to_vmem [thread:$0]  %s113, 2048, %s115, [#allocation12], 64, 64, 4
    $region37: #{tpu_custom_call.1} parent=1 // pred_fallthru
      _
    // Predicated region
    $region38: #{tpu_custom_call.1} parent=1 // pred_check
      _
    $region39: #{tpu_custom_call.1} parent=1 // pred_check_branch
      %122 = sbr.rel (0) target = $region41
    $region40: #{tpu_custom_call.1} parent=1 // pred_region
      _
    $region41: #{tpu_custom_call.1} parent=1 // pred_fallthru
      _
    // Predicated region
    $region42: #{tpu_custom_call.1} parent=1 // pred_check
      _
    $region43: #{tpu_custom_call.1} parent=1 // pred_check_branch
      %124 = sbr.rel (0) target = $region45
    $region44: #{tpu_custom_call.1} parent=1 // pred_region
      %126 = vsyncadd [#allocation15], 0
      %s127 = sshll.u32 %s10, 4
      %s128 = int_to_ptr.hbm [resolvable:$true] %s127
      %s129 = sshll.u32 [#allocation14], 4
      %s130 = int_to_ptr.vmem [resolvable:$true] %s129
      %135 = dma.hbm_to_vmem [thread:$0]  %s128, 2048, %s130, [#allocation15], 64, 64, 4
    $region45: #{tpu_custom_call.1} parent=1 // pred_fallthru
      _
    // Predicated region
    $region46: #{tpu_custom_call.1} parent=1 // pred_check
      _
    $region47: #{tpu_custom_call.1} parent=1 // pred_check_branch
      %137 = sbr.rel (0) target = $region49
    $region48: #{tpu_custom_call.1} parent=1 // pred_region
      _
    $region49: #{tpu_custom_call.1} parent=1 // pred_fallthru
      _
    // Predicated region
    $region50: #{tpu_custom_call.1} parent=1 // pred_check
      _
    $region51: #{tpu_custom_call.1} parent=1 // pred_check_branch
      %139 = sbr.rel (0) target = $region53
    $region52: #{tpu_custom_call.1} parent=1 // pred_region
      _
    $region53: #{tpu_custom_call.1} parent=1 // pred_fallthru
      _
    // Predicated region
    $region54: #{tpu_custom_call.1} parent=1 // pred_check
      _
    $region55: #{tpu_custom_call.1} parent=1 // pred_check_branch
      %141 = sbr.rel (0) target = $region57
    $region56: #{tpu_custom_call.1} parent=1 // pred_region
      _
    $region57: #{tpu_custom_call.1} parent=1 // pred_fallthru
      _
    // Predicated region
    $region58: #{tpu_custom_call.1} parent=1 // pred_check
      _
    $region59: #{tpu_custom_call.1} parent=1 // pred_check_branch
      %143 = sbr.rel (0) target = $region61
    $region60: #{tpu_custom_call.1} parent=1 // pred_region
      %145 = vsyncadd [#allocation15], 0
      %s146 = sshll.u32 %s14, 4
      %s147 = int_to_ptr.hbm [resolvable:$true] %s146
      %s148 = sshll.u32 [#allocation16], 4
      %s149 = int_to_ptr.vmem [resolvable:$true] %s148
      %154 = dma.hbm_to_vmem [thread:$0]  %s147, 32, %s149, [#allocation15], 16, 16, 1
    $region61: #{tpu_custom_call.1} parent=1 // pred_fallthru
      _
    // Predicated region
    $region62: #{tpu_custom_call.1} parent=1 // pred_check
      _
    $region63: #{tpu_custom_call.1} parent=1 // pred_check_branch
      %156 = sbr.rel (0) target = $region65
    $region64: #{tpu_custom_call.1} parent=1 // pred_region
      _
    $region65: #{tpu_custom_call.1} parent=1 // pred_fallthru
      _
    // Predicated region
    $region66: #{tpu_custom_call.1} parent=1 // pred_check
      _
    $region67: #{tpu_custom_call.1} parent=1 // pred_check_branch
      %158 = sbr.rel (0) target = $region69
    $region68: #{tpu_custom_call.1} parent=1 // pred_region
      %160 = vsyncadd [#allocation18], 0
      %s161 = sshll.u32 %s16, 4
      %s162 = int_to_ptr.hbm [resolvable:$true] %s161
      %s163 = sshll.u32 [#allocation17], 4
      %s164 = int_to_ptr.vmem [resolvable:$true] %s163
      %169 = dma.hbm_to_vmem [thread:$0]  %s162, 1024, %s164, [#allocation18], 64, 64, 4
    $region69: #{tpu_custom_call.1} parent=1 // pred_fallthru
      _
    // Predicated region
    $region70: #{tpu_custom_call.1} parent=1 // pred_check
      _
    $region71: #{tpu_custom_call.1} parent=1 // pred_check_branch
      %171 = sbr.rel (0) target = $region73
    $region72: #{tpu_custom_call.1} parent=1 // pred_region
      _
    $region73: #{tpu_custom_call.1} parent=1 // pred_fallthru
      _
    // Predicated region
    $region74: #{tpu_custom_call.1} parent=1 // pred_check
      _
    $region75: #{tpu_custom_call.1} parent=1 // pred_check_branch
      %173 = sbr.rel (0) target = $region77
    $region76: #{tpu_custom_call.1} parent=1 // pred_region
      %175 = dma.done [#allocation3], 128
    $region77: #{tpu_custom_call.1} parent=1 // pred_fallthru
      _
    // Predicated region
    $region78: #{tpu_custom_call.1} parent=1 // pred_check
      _
    $region79: #{tpu_custom_call.1} parent=1 // pred_check_branch
      %177 = sbr.rel (0) target = $region81
    $region80: #{tpu_custom_call.1} parent=1 // pred_region
      %179 = dma.done [#allocation6], 128
    $region81: #{tpu_custom_call.1} parent=1 // pred_fallthru
      _
    // Predicated region
    $region82: #{tpu_custom_call.1} parent=1 // pred_check
      _
    $region83: #{tpu_custom_call.1} parent=1 // pred_check_branch
      %181 = sbr.rel (0) target = $region85
    $region84: #{tpu_custom_call.1} parent=1 // pred_region
      %183 = dma.done [#allocation6], 128
    $region85: #{tpu_custom_call.1} parent=1 // pred_fallthru
      _
    // Predicated region
    $region86: #{tpu_custom_call.1} parent=1 // pred_check
      _
    $region87: #{tpu_custom_call.1} parent=1 // pred_check_branch
      %185 = sbr.rel (0) target = $region89
    $region88: #{tpu_custom_call.1} parent=1 // pred_region
      %187 = dma.done [#allocation9], 16
    $region89: #{tpu_custom_call.1} parent=1 // pred_fallthru
      _
    // Predicated region
    $region90: #{tpu_custom_call.1} parent=1 // pred_check
      _
    $region91: #{tpu_custom_call.1} parent=1 // pred_check_branch
      %189 = sbr.rel (0) target = $region93
    $region92: #{tpu_custom_call.1} parent=1 // pred_region
      %191 = dma.done [#allocation9], 2048
    $region93: #{tpu_custom_call.1} parent=1 // pred_fallthru
      _
    // Predicated region
    $region94: #{tpu_custom_call.1} parent=1 // pred_check
      _
    $region95: #{tpu_custom_call.1} parent=1 // pred_check_branch
      %193 = sbr.rel (0) target = $region97
    $region96: #{tpu_custom_call.1} parent=1 // pred_region
      %195 = dma.done [#allocation12], 512
    $region97: #{tpu_custom_call.1} parent=1 // pred_fallthru
      _
    // Predicated region
    $region98: #{tpu_custom_call.1} parent=1 // pred_check
      _
    $region99: #{tpu_custom_call.1} parent=1 // pred_check_branch
      %197 = sbr.rel (0) target = $region101
    $region100: #{tpu_custom_call.1} parent=1 // pred_region
      %199 = dma.done [#allocation12], 2048
    $region101: #{tpu_custom_call.1} parent=1 // pred_fallthru
      _
    // Predicated region
    $region102: #{tpu_custom_call.1} parent=1 // pred_check
      _
    $region103: #{tpu_custom_call.1} parent=1 // pred_check_branch
      %201 = sbr.rel (0) target = $region105
    $region104: #{tpu_custom_call.1} parent=1 // pred_region
      %203 = dma.done [#allocation15], 2048
    $region105: #{tpu_custom_call.1} parent=1 // pred_fallthru
      _
    // Predicated region
    $region106: #{tpu_custom_call.1} parent=1 // pred_check
      _
    $region107: #{tpu_custom_call.1} parent=1 // pred_check_branch
      %205 = sbr.rel (0) target = $region109
    $region108: #{tpu_custom_call.1} parent=1 // pred_region
      %207 = dma.done [#allocation15], 32
    $region109: #{tpu_custom_call.1} parent=1 // pred_fallthru
      _
    // Predicated region
    $region110: #{tpu_custom_call.1} parent=1 // pred_check
      _
    $region111: #{tpu_custom_call.1} parent=1 // pred_check_branch
      %209 = sbr.rel (0) target = $region113
    $region112: #{tpu_custom_call.1} parent=1 // pred_region
      %211 = dma.done [#allocation18], 1024
    $region113: #{tpu_custom_call.1} parent=1 // pred_fallthru
      _
    %v213 = vld [vmem:[#allocation2] sm:$0xf]
    %v214 = vld [vmem:[#allocation2 + $0x4] sm:$0xf]
    %v215 = vld [vmem:[#allocation7] sm:$0xf]
    %v216 = vld [vmem:[#allocation7 + $0x4] sm:$0xf]
    %v217 = vld [vmem:[#allocation8] sm:$0x1]
    %v219 = vperm.slane %v217, 0
    %v223 = vunpack.c.l.b16 %v213
    %v224 = vunpack.c.l.b16 %v214
    %v225 = vpack.c.b16 %v224, %v223
    %v228 = vunpack.c.l.b16 %v215
    %v229 = vunpack.c.l.b16 %v216
    %v230 = vpack.c.b16 %v229, %v228
    %vm232 = vcmask 130048
    %v234 = vsel %vm232, %v225, 0
    %236 = vmatpush.bf16.msra.mxu0 0
    %237 = vmatpush.bf16.msra.mxu0 0
    %238 = vmatpush.bf16.msra.mxu0 0
    %239 = vmatpush.bf16.msra.mxu0 0
    %240 = vmatpush.bf16.msra.mxu0 0
    %241 = vmatpush.bf16.msra.mxu0 0
    %242 = vmatpush.bf16.msra.mxu0 0
    %243 = vmatpush.bf16.msra.mxu0 %v230
    %244 = vmatmul.bf16.gmra.mxu0 %v234
    %v245 = vpop.f32.mrf.mxu0
    %v246 = vadd.f32 %v219, %v245
    %v247 = vpop.f32.mrf.mxu0
    %v248 = vadd.f32 %v219, %v247
    %249 = vdwg.mxu0
    %v250 = vld [vmem:[#allocation5] sm:$0xff]
    %v251 = vadd.f32 %v246, %v250
    %v252 = vadd.f32 %v248, %v250
    %v253 = vpack.c.bf16 %v252, %v251
    %v254 = vld [vmem:[#allocation10] sm:$0xf]
    %v255 = vld [vmem:[#allocation10 + $0x4] sm:$0xf]
    %v256 = vld [vmem:[#allocation10 + $0x8] sm:$0xf]
    %v257 = vld [vmem:[#allocation10 + $0xc] sm:$0xf]
    %v258 = vld [vmem:[#allocation10 + $0x10] sm:$0xf]
    %v259 = vld [vmem:[#allocation10 + $0x14] sm:$0xf]
    %v260 = vld [vmem:[#allocation10 + $0x18] sm:$0xf]
    %v261 = vld [vmem:[#allocation10 + $0x1c] sm:$0xf]
    %v262 = vld [vmem:[#allocation10 + $0x20] sm:$0xf]
    %v263 = vld [vmem:[#allocation10 + $0x24] sm:$0xf]
    %v264 = vld [vmem:[#allocation10 + $0x28] sm:$0xf]
    %v265 = vld [vmem:[#allocation10 + $0x2c] sm:$0xf]
    %v266 = vld [vmem:[#allocation10 + $0x30] sm:$0xf]
    %v267 = vld [vmem:[#allocation10 + $0x34] sm:$0xf]
    %v268 = vld [vmem:[#allocation10 + $0x38] sm:$0xf]
    %v269 = vld [vmem:[#allocation10 + $0x3c] sm:$0xf]
    %v270 = vld [vmem:[%s5] sm:$0x1]
    %v272 = vperm.slane %v270, 0
    %v290 = vunpack.c.l.b16 %v254
    %v291 = vunpack.c.l.b16 %v255
    %v292 = vunpack.c.l.b16 %v256
    %v293 = vunpack.c.l.b16 %v257
    %v294 = vunpack.c.l.b16 %v258
    %v295 = vunpack.c.l.b16 %v259
    %v296 = vunpack.c.l.b16 %v260
    %v297 = vunpack.c.l.b16 %v261
    %v298 = vunpack.c.l.b16 %v262
    %v299 = vunpack.c.l.b16 %v263
    %v300 = vunpack.c.l.b16 %v264
    %v301 = vunpack.c.l.b16 %v265
    %v302 = vunpack.c.l.b16 %v266
    %v303 = vunpack.c.l.b16 %v267
    %v304 = vunpack.c.l.b16 %v268
    %v305 = vunpack.c.l.b16 %v269
    %v306 = vpack.c.b16 %v291, %v290
    %v307 = vpack.c.b16 %v293, %v292
    %v308 = vpack.c.b16 %v295, %v294
    %v309 = vpack.c.b16 %v297, %v296
    %v310 = vpack.c.b16 %v299, %v298
    %v311 = vpack.c.b16 %v301, %v300
    %v312 = vpack.c.b16 %v303, %v302
    %v313 = vpack.c.b16 %v305, %v304
    %322 = vmatpush.bf16.msra.mxu0 %v313
    %323 = vmatpush.bf16.msra.mxu0 %v312
    %324 = vmatpush.bf16.msra.mxu0 %v311
    %325 = vmatpush.bf16.msra.mxu0 %v310
    %326 = vmatpush.bf16.msra.mxu0 %v309
    %327 = vmatpush.bf16.msra.mxu0 %v308
    %328 = vmatpush.bf16.msra.mxu0 %v307
    %329 = vmatpush.bf16.msra.mxu0 %v306
    %330 = vmatmul.bf16.gmra.mxu0 %v253
    %v331 = vpop.f32.mrf.mxu0
    %v332 = vadd.f32 %v272, %v331
    %v333 = vpop.f32.mrf.mxu0
    %v334 = vadd.f32 %v272, %v333
    %335 = vdwg.mxu0
    %v336 = vpack.c.bf16 %v332, %v332
    %v337 = vpack.c.bf16 %v334, %v334
    %v339 = vunpack.c.l.b16 %v336
    %v340 = vpack.c.b16 %v339, %v339
    %341 = vrot.lane.b32.xlu0 %v340, 96
    %v342 = vpop.permute.xlu0 %341
    %vm343 = vcmask 64512
    %v345 = vsel %vm343, %v336, 0
    %v348 = vsel %vm343, %v342, 0
    %350 = vmatpush.bf16.xpose.msra.mxu0 0
    %351 = vmatpush.bf16.xpose.msra.mxu0 0
    %352 = vmatpush.bf16.xpose.msra.mxu0 0
    %353 = vmatpush.bf16.xpose.msra.mxu0 0
    %354 = vmatpush.bf16.xpose.msra.mxu0 0
    %355 = vmatpush.bf16.xpose.msra.mxu0 0
    %356 = vmatpush.bf16.xpose.msra.mxu0 0
    %357 = vmatpush.bf16.xpose.msra.mxu0 %v348
    %358 = vmatmul.bf16.gmra.mxu0 %v345
    %v359 = vpop.f32.mrf.mxu0
    %v360 = vadd.f32 0.0, %v359
    %v361 = vpop.f32.mrf.mxu0
    %362 = vdwg.mxu0
    %v364 = vunpack.c.l.b16 %v337
    %v365 = vpack.c.b16 %v364, %v364
    %366 = vrot.lane.b32.xlu0 %v365, 96
    %v367 = vpop.permute.xlu0 %366
    %v369 = vsel %vm343, %v337, 0
    %v372 = vsel %vm343, %v367, 0
    %374 = vmatpush.bf16.xpose.msra.mxu0 0
    %375 = vmatpush.bf16.xpose.msra.mxu0 0
    %376 = vmatpush.bf16.xpose.msra.mxu0 0
    %377 = vmatpush.bf16.xpose.msra.mxu0 0
    %378 = vmatpush.bf16.xpose.msra.mxu0 0
    %379 = vmatpush.bf16.xpose.msra.mxu0 0
    %380 = vmatpush.bf16.xpose.msra.mxu0 0
    %381 = vmatpush.bf16.xpose.msra.mxu0 %v372
    %382 = vmatmul.bf16.gmra.mxu0 %v369
    %v383 = vpop.f32.mrf.mxu0
    %v384 = vadd.f32 0.0, %v383
    %v385 = vpop.f32.mrf.mxu0
    %386 = vdwg.mxu0
    %v387 = vsel %vm343, %v360, -inf
    %388 = vmax.xlane.f32.xlu0 %v387
    %v389 = vpop.xlane.xlu0 %388
    %v390 = vsel %vm343, %v384, -inf
    %391 = vmax.xlane.f32.xlu0 %v390
    %v392 = vpop.xlane.xlu0 %391
    %v393 = vsub.f32 %v360, %v389
    %v394 = vsub.f32 %v384, %v392
    %v395 = vmul.f32 %v393, 1.442695
    %v396 = vpow.pop %v395
    %v397 = vmul.f32 %v394, 1.442695
    %v398 = vpow.pop %v397
    %v399 = vsel %vm343, %v396, 0.0
    %400 = vadd.xlane.f32.xlu0 %v399
    %v401 = vpop.xlane.xlu0 %400
    %v402 = vsel %vm343, %v398, 0.0
    %403 = vadd.xlane.f32.xlu0 %v402
    %v404 = vpop.xlane.xlu0 %403
    %v405 = vrcp.pop %v401
    %v406 = vrcp.pop %v404
    %v407 = vmul.f32 %v396, %v405
    %v408 = vmul.f32 %v398, %v406
    %v409 = vpack.c.bf16 %v407, %v407
    %v410 = vpack.c.bf16 %v408, %v408
    %411 = vrot.lane.b32.xlu0 %v340, 64
    %v412 = vpop.permute.xlu0 %411
    %v414 = vsel %vm343, %v409, 0
    %vm416 = vcmask 1043456
    %v418 = vsel %vm416, %v412, 0
    %420 = vmatpush.bf16.msra.mxu0 0
    %421 = vmatpush.bf16.msra.mxu0 0
    %422 = vmatpush.bf16.msra.mxu0 0
    %423 = vmatpush.bf16.msra.mxu0 0
    %424 = vmatpush.bf16.msra.mxu0 0
    %425 = vmatpush.bf16.msra.mxu0 0
    %426 = vmatpush.bf16.msra.mxu0 0
    %427 = vmatpush.bf16.msra.mxu0 %v418
    %428 = vmatmul.bf16.gmra.mxu0 %v414
    %v429 = vpop.f32.mrf.mxu0
    %v430 = vadd.f32 0.0, %v429
    %v431 = vpop.f32.mrf.mxu0
    %432 = vdwg.mxu0
    %433 = vrot.lane.b32.xlu0 %v365, 64
    %v434 = vpop.permute.xlu0 %433
    %v436 = vsel %vm343, %v410, 0
    %v439 = vsel %vm416, %v434, 0
    %441 = vmatpush.bf16.msra.mxu0 0
    %442 = vmatpush.bf16.msra.mxu0 0
    %443 = vmatpush.bf16.msra.mxu0 0
    %444 = vmatpush.bf16.msra.mxu0 0
    %445 = vmatpush.bf16.msra.mxu0 0
    %446 = vmatpush.bf16.msra.mxu0 0
    %447 = vmatpush.bf16.msra.mxu0 0
    %448 = vmatpush.bf16.msra.mxu0 %v439
    %449 = vmatmul.bf16.gmra.mxu0 %v436
    %v450 = vpop.f32.mrf.mxu0
    %v451 = vadd.f32 0.0, %v450
    %v452 = vpop.f32.mrf.mxu0
    %453 = vdwg.mxu0
    %454 = vrot.lane.b32.xlu0 %v340, 120
    %v455 = vpop.permute.xlu0 %454
    %456 = vrot.lane.b32.xlu0 %v340, 88
    %v457 = vpop.permute.xlu0 %456
    %v459 = vsel %vm343, %v455, 0
    %v462 = vsel %vm343, %v457, 0
    %464 = vmatpush.bf16.xpose.msra.mxu0 0
    %465 = vmatpush.bf16.xpose.msra.mxu0 0
    %466 = vmatpush.bf16.xpose.msra.mxu0 0
    %467 = vmatpush.bf16.xpose.msra.mxu0 0
    %468 = vmatpush.bf16.xpose.msra.mxu0 0
    %469 = vmatpush.bf16.xpose.msra.mxu0 0
    %470 = vmatpush.bf16.xpose.msra.mxu0 0
    %471 = vmatpush.bf16.xpose.msra.mxu0 %v462
    %472 = vmatmul.bf16.gmra.mxu0 %v459
    %v473 = vpop.f32.mrf.mxu0
    %v474 = vadd.f32 0.0, %v473
    %v475 = vpop.f32.mrf.mxu0
    %476 = vdwg.mxu0
    %477 = vrot.lane.b32.xlu0 %v365, 120
    %v478 = vpop.permute.xlu0 %477
    %479 = vrot.lane.b32.xlu0 %v365, 88
    %v480 = vpop.permute.xlu0 %479
    %v482 = vsel %vm343, %v478, 0
    %v485 = vsel %vm343, %v480, 0
    %487 = vmatpush.bf16.xpose.msra.mxu0 0
    %488 = vmatpush.bf16.xpose.msra.mxu0 0
    %489 = vmatpush.bf16.xpose.msra.mxu0 0
    %490 = vmatpush.bf16.xpose.msra.mxu0 0
    %491 = vmatpush.bf16.xpose.msra.mxu0 0
    %492 = vmatpush.bf16.xpose.msra.mxu0 0
    %493 = vmatpush.bf16.xpose.msra.mxu0 0
    %494 = vmatpush.bf16.xpose.msra.mxu0 %v485
    %495 = vmatmul.bf16.gmra.mxu0 %v482
    %v496 = vpop.f32.mrf.mxu0
    %v497 = vadd.f32 0.0, %v496
    %v498 = vpop.f32.mrf.mxu0
    %499 = vdwg.mxu0
    %v500 = vsel %vm343, %v474, -inf
    %501 = vmax.xlane.f32.xlu0 %v500
    %v502 = vpop.xlane.xlu0 %501
    %v503 = vsel %vm343, %v497, -inf
    %504 = vmax.xlane.f32.xlu0 %v503
    %v505 = vpop.xlane.xlu0 %504
    %v506 = vsub.f32 %v474, %v502
    %v507 = vsub.f32 %v497, %v505
    %v508 = vmul.f32 %v506, 1.442695
    %v509 = vpow.pop %v508
    %v510 = vmul.f32 %v507, 1.442695
    %v511 = vpow.pop %v510
    %v512 = vsel %vm343, %v509, 0.0
    %513 = vadd.xlane.f32.xlu0 %v512
    %v514 = vpop.xlane.xlu0 %513
    %v515 = vsel %vm343, %v511, 0.0
    %516 = vadd.xlane.f32.xlu0 %v515
    %v517 = vpop.xlane.xlu0 %516
    %v518 = vrcp.pop %v514
    %v519 = vrcp.pop %v517
    %v520 = vmul.f32 %v509, %v518
    %v521 = vmul.f32 %v511, %v519
    %v522 = vpack.c.bf16 %v520, %v520
    %v523 = vpack.c.bf16 %v521, %v521
    %524 = vrot.lane.b32.xlu0 %v340, 56
    %v525 = vpop.permute.xlu0 %524
    %v527 = vsel %vm343, %v522, 0
    %v530 = vsel %vm416, %v525, 0
    %532 = vmatpush.bf16.msra.mxu0 0
    %533 = vmatpush.bf16.msra.mxu0 0
    %534 = vmatpush.bf16.msra.mxu0 0
    %535 = vmatpush.bf16.msra.mxu0 0
    %536 = vmatpush.bf16.msra.mxu0 0
    %537 = vmatpush.bf16.msra.mxu0 0
    %538 = vmatpush.bf16.msra.mxu0 0
    %539 = vmatpush.bf16.msra.mxu0 %v530
    %540 = vmatmul.bf16.gmra.mxu0 %v527
    %v541 = vpop.f32.mrf.mxu0
    %v542 = vadd.f32 0.0, %v541
    %v543 = vpop.f32.mrf.mxu0
    %544 = vdwg.mxu0
    %545 = vrot.lane.b32.xlu0 %v365, 56
    %v546 = vpop.permute.xlu0 %545
    %v548 = vsel %vm343, %v523, 0
    %v551 = vsel %vm416, %v546, 0
    %553 = vmatpush.bf16.msra.mxu0 0
    %554 = vmatpush.bf16.msra.mxu0 0
    %555 = vmatpush.bf16.msra.mxu0 0
    %556 = vmatpush.bf16.msra.mxu0 0
    %557 = vmatpush.bf16.msra.mxu0 0
    %558 = vmatpush.bf16.msra.mxu0 0
    %559 = vmatpush.bf16.msra.mxu0 0
    %560 = vmatpush.bf16.msra.mxu0 %v551
    %561 = vmatmul.bf16.gmra.mxu0 %v548
    %v562 = vpop.f32.mrf.mxu0
    %v563 = vadd.f32 0.0, %v562
    %v564 = vpop.f32.mrf.mxu0
    %565 = vdwg.mxu0
    %566 = vrot.lane.b32.xlu0 %v340, 112
    %v567 = vpop.permute.xlu0 %566
    %568 = vrot.lane.b32.xlu0 %v340, 80
    %v569 = vpop.permute.xlu0 %568
    %v571 = vsel %vm343, %v567, 0
    %v574 = vsel %vm343, %v569, 0
    %576 = vmatpush.bf16.xpose.msra.mxu0 0
    %577 = vmatpush.bf16.xpose.msra.mxu0 0
    %578 = vmatpush.bf16.xpose.msra.mxu0 0
    %579 = vmatpush.bf16.xpose.msra.mxu0 0
    %580 = vmatpush.bf16.xpose.msra.mxu0 0
    %581 = vmatpush.bf16.xpose.msra.mxu0 0
    %582 = vmatpush.bf16.xpose.msra.mxu0 0
    %583 = vmatpush.bf16.xpose.msra.mxu0 %v574
    %584 = vmatmul.bf16.gmra.mxu0 %v571
    %v585 = vpop.f32.mrf.mxu0
    %v586 = vadd.f32 0.0, %v585
    %v587 = vpop.f32.mrf.mxu0
    %588 = vdwg.mxu0
    %589 = vrot.lane.b32.xlu0 %v365, 112
    %v590 = vpop.permute.xlu0 %589
    %591 = vrot.lane.b32.xlu0 %v365, 80
    %v592 = vpop.permute.xlu0 %591
    %v594 = vsel %vm343, %v590, 0
    %v597 = vsel %vm343, %v592, 0
    %599 = vmatpush.bf16.xpose.msra.mxu0 0
    %600 = vmatpush.bf16.xpose.msra.mxu0 0
    %601 = vmatpush.bf16.xpose.msra.mxu0 0
    %602 = vmatpush.bf16.xpose.msra.mxu0 0
    %603 = vmatpush.bf16.xpose.msra.mxu0 0
    %604 = vmatpush.bf16.xpose.msra.mxu0 0
    %605 = vmatpush.bf16.xpose.msra.mxu0 0
    %606 = vmatpush.bf16.xpose.msra.mxu0 %v597
    %607 = vmatmul.bf16.gmra.mxu0 %v594
    %v608 = vpop.f32.mrf.mxu0
    %v609 = vadd.f32 0.0, %v608
    %v610 = vpop.f32.mrf.mxu0
    %611 = vdwg.mxu0
    %v612 = vsel %vm343, %v586, -inf
    %613 = vmax.xlane.f32.xlu0 %v612
    %v614 = vpop.xlane.xlu0 %613
    %v615 = vsel %vm343, %v609, -inf
    %616 = vmax.xlane.f32.xlu0 %v615
    %v617 = vpop.xlane.xlu0 %616
    %v618 = vsub.f32 %v586, %v614
    %v619 = vsub.f32 %v609, %v617
    %v620 = vmul.f32 %v618, 1.442695
    %v621 = vpow.pop %v620
    %v622 = vmul.f32 %v619, 1.442695
    %v623 = vpow.pop %v622
    %v624 = vsel %vm343, %v621, 0.0
    %625 = vadd.xlane.f32.xlu0 %v624
    %v626 = vpop.xlane.xlu0 %625
    %v627 = vsel %vm343, %v623, 0.0
    %628 = vadd.xlane.f32.xlu0 %v627
    %v629 = vpop.xlane.xlu0 %628
    %v630 = vrcp.pop %v626
    %v631 = vrcp.pop %v629
    %v632 = vmul.f32 %v621, %v630
    %v633 = vmul.f32 %v623, %v631
    %v634 = vpack.c.bf16 %v632, %v632
    %v635 = vpack.c.bf16 %v633, %v633
    %636 = vrot.lane.b32.xlu0 %v340, 48
    %v637 = vpop.permute.xlu0 %636
    %v639 = vsel %vm343, %v634, 0
    %v642 = vsel %vm416, %v637, 0
    %644 = vmatpush.bf16.msra.mxu0 0
    %645 = vmatpush.bf16.msra.mxu0 0
    %646 = vmatpush.bf16.msra.mxu0 0
    %647 = vmatpush.bf16.msra.mxu0 0
    %648 = vmatpush.bf16.msra.mxu0 0
    %649 = vmatpush.bf16.msra.mxu0 0
    %650 = vmatpush.bf16.msra.mxu0 0
    %651 = vmatpush.bf16.msra.mxu0 %v642
    %652 = vmatmul.bf16.gmra.mxu0 %v639
    %v653 = vpop.f32.mrf.mxu0
    %v654 = vadd.f32 0.0, %v653
    %v655 = vpop.f32.mrf.mxu0
    %656 = vdwg.mxu0
    %657 = vrot.lane.b32.xlu0 %v365, 48
    %v658 = vpop.permute.xlu0 %657
    %v660 = vsel %vm343, %v635, 0
    %v663 = vsel %vm416, %v658, 0
    %665 = vmatpush.bf16.msra.mxu0 0
    %666 = vmatpush.bf16.msra.mxu0 0
    %667 = vmatpush.bf16.msra.mxu0 0
    %668 = vmatpush.bf16.msra.mxu0 0
    %669 = vmatpush.bf16.msra.mxu0 0
    %670 = vmatpush.bf16.msra.mxu0 0
    %671 = vmatpush.bf16.msra.mxu0 0
    %672 = vmatpush.bf16.msra.mxu0 %v663
    %673 = vmatmul.bf16.gmra.mxu0 %v660
    %v674 = vpop.f32.mrf.mxu0
    %v675 = vadd.f32 0.0, %v674
    %v676 = vpop.f32.mrf.mxu0
    %677 = vdwg.mxu0
    %678 = vrot.lane.b32.xlu0 %v340, 104
    %v679 = vpop.permute.xlu0 %678
    %680 = vrot.lane.b32.xlu0 %v340, 72
    %v681 = vpop.permute.xlu0 %680
    %v683 = vsel %vm343, %v679, 0
    %v686 = vsel %vm343, %v681, 0
    %688 = vmatpush.bf16.xpose.msra.mxu0 0
    %689 = vmatpush.bf16.xpose.msra.mxu0 0
    %690 = vmatpush.bf16.xpose.msra.mxu0 0
    %691 = vmatpush.bf16.xpose.msra.mxu0 0
    %692 = vmatpush.bf16.xpose.msra.mxu0 0
    %693 = vmatpush.bf16.xpose.msra.mxu0 0
    %694 = vmatpush.bf16.xpose.msra.mxu0 0
    %695 = vmatpush.bf16.xpose.msra.mxu0 %v686
    %696 = vmatmul.bf16.gmra.mxu0 %v683
    %v697 = vpop.f32.mrf.mxu0
    %v698 = vadd.f32 0.0, %v697
    %v699 = vpop.f32.mrf.mxu0
    %700 = vdwg.mxu0
    %701 = vrot.lane.b32.xlu0 %v365, 104
    %v702 = vpop.permute.xlu0 %701
    %703 = vrot.lane.b32.xlu0 %v365, 72
    %v704 = vpop.permute.xlu0 %703
    %v706 = vsel %vm343, %v702, 0
    %v709 = vsel %vm343, %v704, 0
    %711 = vmatpush.bf16.xpose.msra.mxu0 0
    %712 = vmatpush.bf16.xpose.msra.mxu0 0
    %713 = vmatpush.bf16.xpose.msra.mxu0 0
    %714 = vmatpush.bf16.xpose.msra.mxu0 0
    %715 = vmatpush.bf16.xpose.msra.mxu0 0
    %716 = vmatpush.bf16.xpose.msra.mxu0 0
    %717 = vmatpush.bf16.xpose.msra.mxu0 0
    %718 = vmatpush.bf16.xpose.msra.mxu0 %v709
    %719 = vmatmul.bf16.gmra.mxu0 %v706
    %v720 = vpop.f32.mrf.mxu0
    %v721 = vadd.f32 0.0, %v720
    %v722 = vpop.f32.mrf.mxu0
    %723 = vdwg.mxu0
    %v724 = vsel %vm343, %v698, -inf
    %725 = vmax.xlane.f32.xlu0 %v724
    %v726 = vpop.xlane.xlu0 %725
    %v727 = vsel %vm343, %v721, -inf
    %728 = vmax.xlane.f32.xlu0 %v727
    %v729 = vpop.xlane.xlu0 %728
    %v730 = vsub.f32 %v698, %v726
    %v731 = vsub.f32 %v721, %v729
    %v732 = vmul.f32 %v730, 1.442695
    %v733 = vpow.pop %v732
    %v734 = vmul.f32 %v731, 1.442695
    %v735 = vpow.pop %v734
    %v736 = vsel %vm343, %v733, 0.0
    %737 = vadd.xlane.f32.xlu0 %v736
    %v738 = vpop.xlane.xlu0 %737
    %v739 = vsel %vm343, %v735, 0.0
    %740 = vadd.xlane.f32.xlu0 %v739
    %v741 = vpop.xlane.xlu0 %740
    %v742 = vrcp.pop %v738
    %v743 = vrcp.pop %v741
    %v744 = vmul.f32 %v733, %v742
    %v745 = vmul.f32 %v735, %v743
    %v746 = vpack.c.bf16 %v744, %v744
    %v747 = vpack.c.bf16 %v745, %v745
    %748 = vrot.lane.b32.xlu0 %v340, 40
    %v749 = vpop.permute.xlu0 %748
    %v751 = vsel %vm343, %v746, 0
    %v754 = vsel %vm416, %v749, 0
    %756 = vmatpush.bf16.msra.mxu0 0
    %757 = vmatpush.bf16.msra.mxu0 0
    %758 = vmatpush.bf16.msra.mxu0 0
    %759 = vmatpush.bf16.msra.mxu0 0
    %760 = vmatpush.bf16.msra.mxu0 0
    %761 = vmatpush.bf16.msra.mxu0 0
    %762 = vmatpush.bf16.msra.mxu0 0
    %763 = vmatpush.bf16.msra.mxu0 %v754
    %764 = vmatmul.bf16.gmra.mxu0 %v751
    %v765 = vpop.f32.mrf.mxu0
    %v766 = vadd.f32 0.0, %v765
    %v767 = vpop.f32.mrf.mxu0
    %768 = vdwg.mxu0
    %769 = vrot.lane.b32.xlu0 %v365, 40
    %v770 = vpop.permute.xlu0 %769
    %v772 = vsel %vm343, %v747, 0
    %v775 = vsel %vm416, %v770, 0
    %777 = vmatpush.bf16.msra.mxu0 0
    %778 = vmatpush.bf16.msra.mxu0 0
    %779 = vmatpush.bf16.msra.mxu0 0
    %780 = vmatpush.bf16.msra.mxu0 0
    %781 = vmatpush.bf16.msra.mxu0 0
    %782 = vmatpush.bf16.msra.mxu0 0
    %783 = vmatpush.bf16.msra.mxu0 0
    %784 = vmatpush.bf16.msra.mxu0 %v775
    %785 = vmatmul.bf16.gmra.mxu0 %v772
    %v786 = vpop.f32.mrf.mxu0
    %v787 = vadd.f32 0.0, %v786
    %v788 = vpop.f32.mrf.mxu0
    %789 = vdwg.mxu0
    %792 = vrot.lane.b32.xlu0 %v542, 8
    %v793 = vpop.permute.xlu0 %792
    %794 = vrot.lane.b32.xlu0 %v563, 8
    %v795 = vpop.permute.xlu0 %794
    %800 = vrot.lane.b32.xlu0 %v654, 16
    %v801 = vpop.permute.xlu0 %800
    %802 = vrot.lane.b32.xlu0 %v675, 16
    %v803 = vpop.permute.xlu0 %802
    %808 = vrot.lane.b32.xlu0 %v766, 24
    %v809 = vpop.permute.xlu0 %808
    %810 = vrot.lane.b32.xlu0 %v787, 24
    %v811 = vpop.permute.xlu0 %810
    %v814 = vsel %vm343, %v430, %v793
    %v815 = vsel %vm343, %v451, %v795
    %v816 = vsel %vm232, %v814, %v801
    %v817 = vsel %vm232, %v815, %v803
    %vm818 = vcmask 195584
    %v819 = vsel %vm818, %v816, %v809
    %v820 = vsel %vm818, %v817, %v811
    %v821 = vpack.c.bf16 %v820, %v819
    %v822 = vld [vmem:[#allocation11] sm:$0xf]
    %v823 = vld [vmem:[#allocation11 + $0x4] sm:$0xf]
    %v824 = vld [vmem:[#allocation11 + $0x8] sm:$0xf]
    %v825 = vld [vmem:[#allocation11 + $0xc] sm:$0xf]
    %v826 = vld [vmem:[%s7] sm:$0x1]
    %v828 = vperm.slane %v826, 0
    %v834 = vunpack.c.l.b16 %v822
    %v835 = vunpack.c.l.b16 %v823
    %v836 = vunpack.c.l.b16 %v824
    %v837 = vunpack.c.l.b16 %v825
    %v838 = vpack.c.b16 %v835, %v834
    %v839 = vpack.c.b16 %v837, %v836
    %vm842 = vcmask 261120
    %v844 = vsel %vm842, %v821, 0
    %846 = vmatpush.bf16.msra.mxu0 0
    %847 = vmatpush.bf16.msra.mxu0 0
    %848 = vmatpush.bf16.msra.mxu0 0
    %849 = vmatpush.bf16.msra.mxu0 0
    %850 = vmatpush.bf16.msra.mxu0 0
    %851 = vmatpush.bf16.msra.mxu0 0
    %852 = vmatpush.bf16.msra.mxu0 %v839
    %853 = vmatpush.bf16.msra.mxu0 %v838
    %854 = vmatmul.bf16.gmra.mxu0 %v844
    %v855 = vpop.f32.mrf.mxu0
    %v856 = vadd.f32 %v828, %v855
    %v857 = vpop.f32.mrf.mxu0
    %v858 = vadd.f32 %v828, %v857
    %859 = vdwg.mxu0
    %v860 = vadd.f32 %v251, %v856
    %v861 = vadd.f32 %v252, %v858
    %v862 = vld [vmem:[%s12] sm:$0x1]
    %v863 = vld [vmem:[%s13] sm:$0x1]
    %864 = vadd.xlane.f32.xlu0 %v860
    %v865 = vpop.xlane.xlu0 %864
    %866 = vadd.xlane.f32.xlu0 %v861
    %v867 = vpop.xlane.xlu0 %866
    %v868 = vmul.f32 %v865, 0.03125
    %v869 = vmul.f32 %v867, 0.03125
    %v870 = vmul.f32 %v860, %v860
    %v871 = vmul.f32 %v861, %v861
    %872 = vadd.xlane.f32.xlu0 %v870
    %v873 = vpop.xlane.xlu0 %872
    %874 = vadd.xlane.f32.xlu0 %v871
    %v875 = vpop.xlane.xlu0 %874
    %v876 = vmul.f32 %v873, 0.03125
    %v877 = vmul.f32 %v875, 0.03125
    %v878 = vmul.f32 %v868, %v868
    %v879 = vmul.f32 %v869, %v869
    %v880 = vsub.f32 %v876, %v878
    %v881 = vsub.f32 %v877, %v879
    %v882 = vsub.f32 %v860, %v868
    %v883 = vsub.f32 %v861, %v869
    %v884 = vadd.f32 %v880, 1e-05
    %v885 = vadd.f32 %v881, 1e-05
    %v886 = vrsqrt.pop %v884
    %v887 = vmul.f32 %v886, %v884
    %v888 = vmul.f32 %v887, %v886
    %v889 = vmul.f32 0.5, %v888
    %v890 = vsub.f32 1.5, %v889
    %v891 = vmul.f32 %v886, %v890
    %vm892 = vweird.f32 %v884
    %vm893 = vweird.f32 %v886
    %vm894 = vmor %vm892, %vm893
    %v895 = vsel %vm894, %v886, %v891
    %v896 = vrsqrt.pop %v885
    %v897 = vmul.f32 %v896, %v885
    %v898 = vmul.f32 %v897, %v896
    %v899 = vmul.f32 0.5, %v898
    %v900 = vsub.f32 1.5, %v899
    %v901 = vmul.f32 %v896, %v900
    %vm902 = vweird.f32 %v885
    %vm903 = vweird.f32 %v896
    %vm904 = vmor %vm902, %vm903
    %v905 = vsel %vm904, %v896, %v901
    %v906 = vmul.f32 %v882, %v895
    %v907 = vmul.f32 %v883, %v905
    %v909 = vperm.slane %v862, 0
    %v911 = vmul.f32 %v906, %v909
    %v912 = vmul.f32 %v907, %v909
    %v914 = vperm.slane %v863, 0
    %v916 = vadd.f32 %v911, %v914
    %v917 = vadd.f32 %v912, %v914
    %v918 = vpack.c.bf16 %v917, %v916
    %v919 = vld [vmem:[#allocation13] sm:$0xf]
    %v920 = vld [vmem:[#allocation13 + $0x4] sm:$0xf]
    %v921 = vld [vmem:[#allocation13 + $0x8] sm:$0xf]
    %v922 = vld [vmem:[#allocation13 + $0xc] sm:$0xf]
    %v923 = vld [vmem:[#allocation13 + $0x10] sm:$0xf]
    %v924 = vld [vmem:[#allocation13 + $0x14] sm:$0xf]
    %v925 = vld [vmem:[#allocation13 + $0x18] sm:$0xf]
    %v926 = vld [vmem:[#allocation13 + $0x1c] sm:$0xf]
    %v927 = vld [vmem:[#allocation13 + $0x20] sm:$0xf]
    %v928 = vld [vmem:[#allocation13 + $0x24] sm:$0xf]
    %v929 = vld [vmem:[#allocation13 + $0x28] sm:$0xf]
    %v930 = vld [vmem:[#allocation13 + $0x2c] sm:$0xf]
    %v931 = vld [vmem:[#allocation13 + $0x30] sm:$0xf]
    %v932 = vld [vmem:[#allocation13 + $0x34] sm:$0xf]
    %v933 = vld [vmem:[#allocation13 + $0x38] sm:$0xf]
    %v934 = vld [vmem:[#allocation13 + $0x3c] sm:$0xf]
    %v935 = vld [vmem:[%s9] sm:$0x1]
    %v937 = vperm.slane %v935, 0
    %v955 = vunpack.c.l.b16 %v919
    %v956 = vunpack.c.l.b16 %v920
    %v957 = vunpack.c.l.b16 %v921
    %v958 = vunpack.c.l.b16 %v922
    %v959 = vunpack.c.l.b16 %v923
    %v960 = vunpack.c.l.b16 %v924
    %v961 = vunpack.c.l.b16 %v925
    %v962 = vunpack.c.l.b16 %v926
    %v963 = vunpack.c.l.b16 %v927
    %v964 = vunpack.c.l.b16 %v928
    %v965 = vunpack.c.l.b16 %v929
    %v966 = vunpack.c.l.b16 %v930
    %v967 = vunpack.c.l.b16 %v931
    %v968 = vunpack.c.l.b16 %v932
    %v969 = vunpack.c.l.b16 %v933
    %v970 = vunpack.c.l.b16 %v934
    %v971 = vpack.c.b16 %v956, %v955
    %v972 = vpack.c.b16 %v958, %v957
    %v973 = vpack.c.b16 %v960, %v959
    %v974 = vpack.c.b16 %v962, %v961
    %v975 = vpack.c.b16 %v964, %v963
    %v976 = vpack.c.b16 %v966, %v965
    %v977 = vpack.c.b16 %v968, %v967
    %v978 = vpack.c.b16 %v970, %v969
    %987 = vmatpush.bf16.msra.mxu0 %v978
    %988 = vmatpush.bf16.msra.mxu0 %v977
    %989 = vmatpush.bf16.msra.mxu0 %v976
    %990 = vmatpush.bf16.msra.mxu0 %v975
    %991 = vmatpush.bf16.msra.mxu0 %v974
    %992 = vmatpush.bf16.msra.mxu0 %v973
    %993 = vmatpush.bf16.msra.mxu0 %v972
    %994 = vmatpush.bf16.msra.mxu0 %v971
    %995 = vmatmul.bf16.gmra.mxu0 %v918
    %v996 = vpop.f32.mrf.mxu0
    %v997 = vadd.f32 %v937, %v996
    %v998 = vpop.f32.mrf.mxu0
    %v999 = vadd.f32 %v937, %v998
    %1000 = vdwg.mxu0
    %v1001 = vmax.f32 %v997, 0.0
    %v1002 = vmax.f32 %v999, 0.0
    %v1003 = vpack.c.bf16 %v1002, %v1001
    %v1004 = vld [vmem:[#allocation14] sm:$0xf]
    %v1005 = vld [vmem:[#allocation14 + $0x4] sm:$0xf]
    %v1006 = vld [vmem:[#allocation14 + $0x8] sm:$0xf]
    %v1007 = vld [vmem:[#allocation14 + $0xc] sm:$0xf]
    %v1008 = vld [vmem:[#allocation14 + $0x10] sm:$0xf]
    %v1009 = vld [vmem:[#allocation14 + $0x14] sm:$0xf]
    %v1010 = vld [vmem:[#allocation14 + $0x18] sm:$0xf]
    %v1011 = vld [vmem:[#allocation14 + $0x1c] sm:$0xf]
    %v1012 = vld [vmem:[#allocation14 + $0x20] sm:$0xf]
    %v1013 = vld [vmem:[#allocation14 + $0x24] sm:$0xf]
    %v1014 = vld [vmem:[#allocation14 + $0x28] sm:$0xf]
    %v1015 = vld [vmem:[#allocation14 + $0x2c] sm:$0xf]
    %v1016 = vld [vmem:[#allocation14 + $0x30] sm:$0xf]
    %v1017 = vld [vmem:[#allocation14 + $0x34] sm:$0xf]
    %v1018 = vld [vmem:[#allocation14 + $0x38] sm:$0xf]
    %v1019 = vld [vmem:[#allocation14 + $0x3c] sm:$0xf]
    %v1020 = vld [vmem:[%s11] sm:$0x1]
    %v1022 = vperm.slane %v1020, 0
    %v1040 = vunpack.c.l.b16 %v1004
    %v1041 = vunpack.c.l.b16 %v1005
    %v1042 = vunpack.c.l.b16 %v1006
    %v1043 = vunpack.c.l.b16 %v1007
    %v1044 = vunpack.c.l.b16 %v1008
    %v1045 = vunpack.c.l.b16 %v1009
    %v1046 = vunpack.c.l.b16 %v1010
    %v1047 = vunpack.c.l.b16 %v1011
    %v1048 = vunpack.c.l.b16 %v1012
    %v1049 = vunpack.c.l.b16 %v1013
    %v1050 = vunpack.c.l.b16 %v1014
    %v1051 = vunpack.c.l.b16 %v1015
    %v1052 = vunpack.c.l.b16 %v1016
    %v1053 = vunpack.c.l.b16 %v1017
    %v1054 = vunpack.c.l.b16 %v1018
    %v1055 = vunpack.c.l.b16 %v1019
    %v1056 = vpack.c.b16 %v1041, %v1040
    %v1057 = vpack.c.b16 %v1043, %v1042
    %v1058 = vpack.c.b16 %v1045, %v1044
    %v1059 = vpack.c.b16 %v1047, %v1046
    %v1060 = vpack.c.b16 %v1049, %v1048
    %v1061 = vpack.c.b16 %v1051, %v1050
    %v1062 = vpack.c.b16 %v1053, %v1052
    %v1063 = vpack.c.b16 %v1055, %v1054
    %1072 = vmatpush.bf16.msra.mxu0 %v1063
    %1073 = vmatpush.bf16.msra.mxu0 %v1062
    %1074 = vmatpush.bf16.msra.mxu0 %v1061
    %1075 = vmatpush.bf16.msra.mxu0 %v1060
    %1076 = vmatpush.bf16.msra.mxu0 %v1059
    %1077 = vmatpush.bf16.msra.mxu0 %v1058
    %1078 = vmatpush.bf16.msra.mxu0 %v1057
    %1079 = vmatpush.bf16.msra.mxu0 %v1056
    %1080 = vmatmul.bf16.gmra.mxu0 %v1003
    %v1081 = vpop.f32.mrf.mxu0
    %v1082 = vadd.f32 %v1022, %v1081
    %v1083 = vpop.f32.mrf.mxu0
    %v1084 = vadd.f32 %v1022, %v1083
    %1085 = vdwg.mxu0
    %v1086 = vadd.f32 %v916, %v1082
    %v1087 = vadd.f32 %v917, %v1084
    %v1088 = vld [vmem:[#allocation16] sm:$0x1]
    %v1089 = vld [vmem:[%s15] sm:$0x1]
    %1090 = vadd.xlane.f32.xlu0 %v1086
    %v1091 = vpop.xlane.xlu0 %1090
    %1092 = vadd.xlane.f32.xlu0 %v1087
    %v1093 = vpop.xlane.xlu0 %1092
    %v1094 = vmul.f32 %v1091, 0.03125
    %v1095 = vmul.f32 %v1093, 0.03125
    %v1096 = vmul.f32 %v1086, %v1086
    %v1097 = vmul.f32 %v1087, %v1087
    %1098 = vadd.xlane.f32.xlu0 %v1096
    %v1099 = vpop.xlane.xlu0 %1098
    %1100 = vadd.xlane.f32.xlu0 %v1097
    %v1101 = vpop.xlane.xlu0 %1100
    %v1102 = vmul.f32 %v1099, 0.03125
    %v1103 = vmul.f32 %v1101, 0.03125
    %v1104 = vmul.f32 %v1094, %v1094
    %v1105 = vmul.f32 %v1095, %v1095
    %v1106 = vsub.f32 %v1102, %v1104
    %v1107 = vsub.f32 %v1103, %v1105
    %v1108 = vsub.f32 %v1086, %v1094
    %v1109 = vsub.f32 %v1087, %v1095
    %v1110 = vadd.f32 %v1106, 1e-05
    %v1111 = vadd.f32 %v1107, 1e-05
    %v1112 = vrsqrt.pop %v1110
    %v1113 = vmul.f32 %v1112, %v1110
    %v1114 = vmul.f32 %v1113, %v1112
    %v1115 = vmul.f32 0.5, %v1114
    %v1116 = vsub.f32 1.5, %v1115
    %v1117 = vmul.f32 %v1112, %v1116
    %vm1118 = vweird.f32 %v1110
    %vm1119 = vweird.f32 %v1112
    %vm1120 = vmor %vm1118, %vm1119
    %v1121 = vsel %vm1120, %v1112, %v1117
    %v1122 = vrsqrt.pop %v1111
    %v1123 = vmul.f32 %v1122, %v1111
    %v1124 = vmul.f32 %v1123, %v1122
    %v1125 = vmul.f32 0.5, %v1124
    %v1126 = vsub.f32 1.5, %v1125
    %v1127 = vmul.f32 %v1122, %v1126
    %vm1128 = vweird.f32 %v1111
    %vm1129 = vweird.f32 %v1122
    %vm1130 = vmor %vm1128, %vm1129
    %v1131 = vsel %vm1130, %v1122, %v1127
    %v1132 = vmul.f32 %v1108, %v1121
    %v1133 = vmul.f32 %v1109, %v1131
    %v1135 = vperm.slane %v1088, 0
    %v1137 = vmul.f32 %v1132, %v1135
    %v1138 = vmul.f32 %v1133, %v1135
    %v1140 = vperm.slane %v1089, 0
    %v1142 = vadd.f32 %v1137, %v1140
    %v1143 = vadd.f32 %v1138, %v1140
    %v1144 = vpack.c.bf16 %v1143, %v1142
    %s1145 = scalar_lea.vmem [#allocation10], 64
    %v1146 = vld [vmem:[%s1145] sm:$0xf]
    %v1147 = vld [vmem:[%s1145 + $0x4] sm:$0xf]
    %v1148 = vld [vmem:[%s1145 + $0x8] sm:$0xf]
    %v1149 = vld [vmem:[%s1145 + $0xc] sm:$0xf]
    %v1150 = vld [vmem:[%s1145 + $0x10] sm:$0xf]
    %v1151 = vld [vmem:[%s1145 + $0x14] sm:$0xf]
    %v1152 = vld [vmem:[%s1145 + $0x18] sm:$0xf]
    %v1153 = vld [vmem:[%s1145 + $0x1c] sm:$0xf]
    %v1154 = vld [vmem:[%s1145 + $0x20] sm:$0xf]
    %v1155 = vld [vmem:[%s1145 + $0x24] sm:$0xf]
    %v1156 = vld [vmem:[%s1145 + $0x28] sm:$0xf]
    %v1157 = vld [vmem:[%s1145 + $0x2c] sm:$0xf]
    %v1158 = vld [vmem:[%s1145 + $0x30] sm:$0xf]
    %v1159 = vld [vmem:[%s1145 + $0x34] sm:$0xf]
    %v1160 = vld [vmem:[%s1145 + $0x38] sm:$0xf]
    %v1161 = vld [vmem:[%s1145 + $0x3c] sm:$0xf]
    %s1162 = scalar_lea.vmem %s5, 1
    %v1163 = vld [vmem:[%s1162] sm:$0x1]
    %v1165 = vperm.slane %v1163, 0
    %v1183 = vunpack.c.l.b16 %v1146
    %v1184 = vunpack.c.l.b16 %v1147
    %v1185 = vunpack.c.l.b16 %v1148
    %v1186 = vunpack.c.l.b16 %v1149
    %v1187 = vunpack.c.l.b16 %v1150
    %v1188 = vunpack.c.l.b16 %v1151
    %v1189 = vunpack.c.l.b16 %v1152
    %v1190 = vunpack.c.l.b16 %v1153
    %v1191 = vunpack.c.l.b16 %v1154
    %v1192 = vunpack.c.l.b16 %v1155
    %v1193 = vunpack.c.l.b16 %v1156
    %v1194 = vunpack.c.l.b16 %v1157
    %v1195 = vunpack.c.l.b16 %v1158
    %v1196 = vunpack.c.l.b16 %v1159
    %v1197 = vunpack.c.l.b16 %v1160
    %v1198 = vunpack.c.l.b16 %v1161
    %v1199 = vpack.c.b16 %v1184, %v1183
    %v1200 = vpack.c.b16 %v1186, %v1185
    %v1201 = vpack.c.b16 %v1188, %v1187
    %v1202 = vpack.c.b16 %v1190, %v1189
    %v1203 = vpack.c.b16 %v1192, %v1191
    %v1204 = vpack.c.b16 %v1194, %v1193
    %v1205 = vpack.c.b16 %v1196, %v1195
    %v1206 = vpack.c.b16 %v1198, %v1197
    %1215 = vmatpush.bf16.msra.mxu0 %v1206
    %1216 = vmatpush.bf16.msra.mxu0 %v1205
    %1217 = vmatpush.bf16.msra.mxu0 %v1204
    %1218 = vmatpush.bf16.msra.mxu0 %v1203
    %1219 = vmatpush.bf16.msra.mxu0 %v1202
    %1220 = vmatpush.bf16.msra.mxu0 %v1201
    %1221 = vmatpush.bf16.msra.mxu0 %v1200
    %1222 = vmatpush.bf16.msra.mxu0 %v1199
    %1223 = vmatmul.bf16.gmra.mxu0 %v1144
    %v1224 = vpop.f32.mrf.mxu0
    %v1225 = vadd.f32 %v1165, %v1224
    %v1226 = vpop.f32.mrf.mxu0
    %v1227 = vadd.f32 %v1165, %v1226
    %1228 = vdwg.mxu0
    %v1229 = vpack.c.bf16 %v1225, %v1225
    %v1230 = vpack.c.bf16 %v1227, %v1227
    %v1232 = vunpack.c.l.b16 %v1229
    %v1233 = vpack.c.b16 %v1232, %v1232
    %1234 = vrot.lane.b32.xlu0 %v1233, 96
    %v1235 = vpop.permute.xlu0 %1234
    %v1237 = vsel %vm343, %v1229, 0
    %v1240 = vsel %vm343, %v1235, 0
    %1242 = vmatpush.bf16.xpose.msra.mxu0 0
    %1243 = vmatpush.bf16.xpose.msra.mxu0 0
    %1244 = vmatpush.bf16.xpose.msra.mxu0 0
    %1245 = vmatpush.bf16.xpose.msra.mxu0 0
    %1246 = vmatpush.bf16.xpose.msra.mxu0 0
    %1247 = vmatpush.bf16.xpose.msra.mxu0 0
    %1248 = vmatpush.bf16.xpose.msra.mxu0 0
    %1249 = vmatpush.bf16.xpose.msra.mxu0 %v1240
    %1250 = vmatmul.bf16.gmra.mxu0 %v1237
    %v1251 = vpop.f32.mrf.mxu0
    %v1252 = vadd.f32 0.0, %v1251
    %v1253 = vpop.f32.mrf.mxu0
    %1254 = vdwg.mxu0
    %v1256 = vunpack.c.l.b16 %v1230
    %v1257 = vpack.c.b16 %v1256, %v1256
    %1258 = vrot.lane.b32.xlu0 %v1257, 96
    %v1259 = vpop.permute.xlu0 %1258
    %v1261 = vsel %vm343, %v1230, 0
    %v1264 = vsel %vm343, %v1259, 0
    %1266 = vmatpush.bf16.xpose.msra.mxu0 0
    %1267 = vmatpush.bf16.xpose.msra.mxu0 0
    %1268 = vmatpush.bf16.xpose.msra.mxu0 0
    %1269 = vmatpush.bf16.xpose.msra.mxu0 0
    %1270 = vmatpush.bf16.xpose.msra.mxu0 0
    %1271 = vmatpush.bf16.xpose.msra.mxu0 0
    %1272 = vmatpush.bf16.xpose.msra.mxu0 0
    %1273 = vmatpush.bf16.xpose.msra.mxu0 %v1264
    %1274 = vmatmul.bf16.gmra.mxu0 %v1261
    %v1275 = vpop.f32.mrf.mxu0
    %v1276 = vadd.f32 0.0, %v1275
    %v1277 = vpop.f32.mrf.mxu0
    %1278 = vdwg.mxu0
    %v1279 = vsel %vm343, %v1252, -inf
    %1280 = vmax.xlane.f32.xlu0 %v1279
    %v1281 = vpop.xlane.xlu0 %1280
    %v1282 = vsel %vm343, %v1276, -inf
    %1283 = vmax.xlane.f32.xlu0 %v1282
    %v1284 = vpop.xlane.xlu0 %1283
    %v1285 = vsub.f32 %v1252, %v1281
    %v1286 = vsub.f32 %v1276, %v1284
    %v1287 = vmul.f32 %v1285, 1.442695
    %v1288 = vpow.pop %v1287
    %v1289 = vmul.f32 %v1286, 1.442695
    %v1290 = vpow.pop %v1289
    %v1291 = vsel %vm343, %v1288, 0.0
    %1292 = vadd.xlane.f32.xlu0 %v1291
    %v1293 = vpop.xlane.xlu0 %1292
    %v1294 = vsel %vm343, %v1290, 0.0
    %1295 = vadd.xlane.f32.xlu0 %v1294
    %v1296 = vpop.xlane.xlu0 %1295
    %v1297 = vrcp.pop %v1293
    %v1298 = vrcp.pop %v1296
    %v1299 = vmul.f32 %v1288, %v1297
    %v1300 = vmul.f32 %v1290, %v1298
    %v1301 = vpack.c.bf16 %v1299, %v1299
    %v1302 = vpack.c.bf16 %v1300, %v1300
    %1303 = vrot.lane.b32.xlu0 %v1233, 64
    %v1304 = vpop.permute.xlu0 %1303
    %v1306 = vsel %vm343, %v1301, 0
    %v1309 = vsel %vm416, %v1304, 0
    %1311 = vmatpush.bf16.msra.mxu0 0
    %1312 = vmatpush.bf16.msra.mxu0 0
    %1313 = vmatpush.bf16.msra.mxu0 0
    %1314 = vmatpush.bf16.msra.mxu0 0
    %1315 = vmatpush.bf16.msra.mxu0 0
    %1316 = vmatpush.bf16.msra.mxu0 0
    %1317 = vmatpush.bf16.msra.mxu0 0
    %1318 = vmatpush.bf16.msra.mxu0 %v1309
    %1319 = vmatmul.bf16.gmra.mxu0 %v1306
    %v1320 = vpop.f32.mrf.mxu0
    %v1321 = vadd.f32 0.0, %v1320
    %v1322 = vpop.f32.mrf.mxu0
    %1323 = vdwg.mxu0
    %1324 = vrot.lane.b32.xlu0 %v1257, 64
    %v1325 = vpop.permute.xlu0 %1324
    %v1327 = vsel %vm343, %v1302, 0
    %v1330 = vsel %vm416, %v1325, 0
    %1332 = vmatpush.bf16.msra.mxu0 0
    %1333 = vmatpush.bf16.msra.mxu0 0
    %1334 = vmatpush.bf16.msra.mxu0 0
    %1335 = vmatpush.bf16.msra.mxu0 0
    %1336 = vmatpush.bf16.msra.mxu0 0
    %1337 = vmatpush.bf16.msra.mxu0 0
    %1338 = vmatpush.bf16.msra.mxu0 0
    %1339 = vmatpush.bf16.msra.mxu0 %v1330
    %1340 = vmatmul.bf16.gmra.mxu0 %v1327
    %v1341 = vpop.f32.mrf.mxu0
    %v1342 = vadd.f32 0.0, %v1341
    %v1343 = vpop.f32.mrf.mxu0
    %1344 = vdwg.mxu0
    %1345 = vrot.lane.b32.xlu0 %v1233, 120
    %v1346 = vpop.permute.xlu0 %1345
    %1347 = vrot.lane.b32.xlu0 %v1233, 88
    %v1348 = vpop.permute.xlu0 %1347
    %v1350 = vsel %vm343, %v1346, 0
    %v1353 = vsel %vm343, %v1348, 0
    %1355 = vmatpush.bf16.xpose.msra.mxu0 0
    %1356 = vmatpush.bf16.xpose.msra.mxu0 0
    %1357 = vmatpush.bf16.xpose.msra.mxu0 0
    %1358 = vmatpush.bf16.xpose.msra.mxu0 0
    %1359 = vmatpush.bf16.xpose.msra.mxu0 0
    %1360 = vmatpush.bf16.xpose.msra.mxu0 0
    %1361 = vmatpush.bf16.xpose.msra.mxu0 0
    %1362 = vmatpush.bf16.xpose.msra.mxu0 %v1353
    %1363 = vmatmul.bf16.gmra.mxu0 %v1350
    %v1364 = vpop.f32.mrf.mxu0
    %v1365 = vadd.f32 0.0, %v1364
    %v1366 = vpop.f32.mrf.mxu0
    %1367 = vdwg.mxu0
    %1368 = vrot.lane.b32.xlu0 %v1257, 120
    %v1369 = vpop.permute.xlu0 %1368
    %1370 = vrot.lane.b32.xlu0 %v1257, 88
    %v1371 = vpop.permute.xlu0 %1370
    %v1373 = vsel %vm343, %v1369, 0
    %v1376 = vsel %vm343, %v1371, 0
    %1378 = vmatpush.bf16.xpose.msra.mxu0 0
    %1379 = vmatpush.bf16.xpose.msra.mxu0 0
    %1380 = vmatpush.bf16.xpose.msra.mxu0 0
    %1381 = vmatpush.bf16.xpose.msra.mxu0 0
    %1382 = vmatpush.bf16.xpose.msra.mxu0 0
    %1383 = vmatpush.bf16.xpose.msra.mxu0 0
    %1384 = vmatpush.bf16.xpose.msra.mxu0 0
    %1385 = vmatpush.bf16.xpose.msra.mxu0 %v1376
    %1386 = vmatmul.bf16.gmra.mxu0 %v1373
    %v1387 = vpop.f32.mrf.mxu0
    %v1388 = vadd.f32 0.0, %v1387
    %v1389 = vpop.f32.mrf.mxu0
    %1390 = vdwg.mxu0
    %v1391 = vsel %vm343, %v1365, -inf
    %1392 = vmax.xlane.f32.xlu0 %v1391
    %v1393 = vpop.xlane.xlu0 %1392
    %v1394 = vsel %vm343, %v1388, -inf
    %1395 = vmax.xlane.f32.xlu0 %v1394
    %v1396 = vpop.xlane.xlu0 %1395
    %v1397 = vsub.f32 %v1365, %v1393
    %v1398 = vsub.f32 %v1388, %v1396
    %v1399 = vmul.f32 %v1397, 1.442695
    %v1400 = vpow.pop %v1399
    %v1401 = vmul.f32 %v1398, 1.442695
    %v1402 = vpow.pop %v1401
    %v1403 = vsel %vm343, %v1400, 0.0
    %1404 = vadd.xlane.f32.xlu0 %v1403
    %v1405 = vpop.xlane.xlu0 %1404
    %v1406 = vsel %vm343, %v1402, 0.0
    %1407 = vadd.xlane.f32.xlu0 %v1406
    %v1408 = vpop.xlane.xlu0 %1407
    %v1409 = vrcp.pop %v1405
    %v1410 = vrcp.pop %v1408
    %v1411 = vmul.f32 %v1400, %v1409
    %v1412 = vmul.f32 %v1402, %v1410
    %v1413 = vpack.c.bf16 %v1411, %v1411
    %v1414 = vpack.c.bf16 %v1412, %v1412
    %1415 = vrot.lane.b32.xlu0 %v1233, 56
    %v1416 = vpop.permute.xlu0 %1415
    %v1418 = vsel %vm343, %v1413, 0
    %v1421 = vsel %vm416, %v1416, 0
    %1423 = vmatpush.bf16.msra.mxu0 0
    %1424 = vmatpush.bf16.msra.mxu0 0
    %1425 = vmatpush.bf16.msra.mxu0 0
    %1426 = vmatpush.bf16.msra.mxu0 0
    %1427 = vmatpush.bf16.msra.mxu0 0
    %1428 = vmatpush.bf16.msra.mxu0 0
    %1429 = vmatpush.bf16.msra.mxu0 0
    %1430 = vmatpush.bf16.msra.mxu0 %v1421
    %1431 = vmatmul.bf16.gmra.mxu0 %v1418
    %v1432 = vpop.f32.mrf.mxu0
    %v1433 = vadd.f32 0.0, %v1432
    %v1434 = vpop.f32.mrf.mxu0
    %1435 = vdwg.mxu0
    %1436 = vrot.lane.b32.xlu0 %v1257, 56
    %v1437 = vpop.permute.xlu0 %1436
    %v1439 = vsel %vm343, %v1414, 0
    %v1442 = vsel %vm416, %v1437, 0
    %1444 = vmatpush.bf16.msra.mxu0 0
    %1445 = vmatpush.bf16.msra.mxu0 0
    %1446 = vmatpush.bf16.msra.mxu0 0
    %1447 = vmatpush.bf16.msra.mxu0 0
    %1448 = vmatpush.bf16.msra.mxu0 0
    %1449 = vmatpush.bf16.msra.mxu0 0
    %1450 = vmatpush.bf16.msra.mxu0 0
    %1451 = vmatpush.bf16.msra.mxu0 %v1442
    %1452 = vmatmul.bf16.gmra.mxu0 %v1439
    %v1453 = vpop.f32.mrf.mxu0
    %v1454 = vadd.f32 0.0, %v1453
    %v1455 = vpop.f32.mrf.mxu0
    %1456 = vdwg.mxu0
    %1457 = vrot.lane.b32.xlu0 %v1233, 112
    %v1458 = vpop.permute.xlu0 %1457
    %1459 = vrot.lane.b32.xlu0 %v1233, 80
    %v1460 = vpop.permute.xlu0 %1459
    %v1462 = vsel %vm343, %v1458, 0
    %v1465 = vsel %vm343, %v1460, 0
    %1467 = vmatpush.bf16.xpose.msra.mxu0 0
    %1468 = vmatpush.bf16.xpose.msra.mxu0 0
    %1469 = vmatpush.bf16.xpose.msra.mxu0 0
    %1470 = vmatpush.bf16.xpose.msra.mxu0 0
    %1471 = vmatpush.bf16.xpose.msra.mxu0 0
    %1472 = vmatpush.bf16.xpose.msra.mxu0 0
    %1473 = vmatpush.bf16.xpose.msra.mxu0 0
    %1474 = vmatpush.bf16.xpose.msra.mxu0 %v1465
    %1475 = vmatmul.bf16.gmra.mxu0 %v1462
    %v1476 = vpop.f32.mrf.mxu0
    %v1477 = vadd.f32 0.0, %v1476
    %v1478 = vpop.f32.mrf.mxu0
    %1479 = vdwg.mxu0
    %1480 = vrot.lane.b32.xlu0 %v1257, 112
    %v1481 = vpop.permute.xlu0 %1480
    %1482 = vrot.lane.b32.xlu0 %v1257, 80
    %v1483 = vpop.permute.xlu0 %1482
    %v1485 = vsel %vm343, %v1481, 0
    %v1488 = vsel %vm343, %v1483, 0
    %1490 = vmatpush.bf16.xpose.msra.mxu0 0
    %1491 = vmatpush.bf16.xpose.msra.mxu0 0
    %1492 = vmatpush.bf16.xpose.msra.mxu0 0
    %1493 = vmatpush.bf16.xpose.msra.mxu0 0
    %1494 = vmatpush.bf16.xpose.msra.mxu0 0
    %1495 = vmatpush.bf16.xpose.msra.mxu0 0
    %1496 = vmatpush.bf16.xpose.msra.mxu0 0
    %1497 = vmatpush.bf16.xpose.msra.mxu0 %v1488
    %1498 = vmatmul.bf16.gmra.mxu0 %v1485
    %v1499 = vpop.f32.mrf.mxu0
    %v1500 = vadd.f32 0.0, %v1499
    %v1501 = vpop.f32.mrf.mxu0
    %1502 = vdwg.mxu0
    %v1503 = vsel %vm343, %v1477, -inf
    %1504 = vmax.xlane.f32.xlu0 %v1503
    %v1505 = vpop.xlane.xlu0 %1504
    %v1506 = vsel %vm343, %v1500, -inf
    %1507 = vmax.xlane.f32.xlu0 %v1506
    %v1508 = vpop.xlane.xlu0 %1507
    %v1509 = vsub.f32 %v1477, %v1505
    %v1510 = vsub.f32 %v1500, %v1508
    %v1511 = vmul.f32 %v1509, 1.442695
    %v1512 = vpow.pop %v1511
    %v1513 = vmul.f32 %v1510, 1.442695
    %v1514 = vpow.pop %v1513
    %v1515 = vsel %vm343, %v1512, 0.0
    %1516 = vadd.xlane.f32.xlu0 %v1515
    %v1517 = vpop.xlane.xlu0 %1516
    %v1518 = vsel %vm343, %v1514, 0.0
    %1519 = vadd.xlane.f32.xlu0 %v1518
    %v1520 = vpop.xlane.xlu0 %1519
    %v1521 = vrcp.pop %v1517
    %v1522 = vrcp.pop %v1520
    %v1523 = vmul.f32 %v1512, %v1521
    %v1524 = vmul.f32 %v1514, %v1522
    %v1525 = vpack.c.bf16 %v1523, %v1523
    %v1526 = vpack.c.bf16 %v1524, %v1524
    %1527 = vrot.lane.b32.xlu0 %v1233, 48
    %v1528 = vpop.permute.xlu0 %1527
    %v1530 = vsel %vm343, %v1525, 0
    %v1533 = vsel %vm416, %v1528, 0
    %1535 = vmatpush.bf16.msra.mxu0 0
    %1536 = vmatpush.bf16.msra.mxu0 0
    %1537 = vmatpush.bf16.msra.mxu0 0
    %1538 = vmatpush.bf16.msra.mxu0 0
    %1539 = vmatpush.bf16.msra.mxu0 0
    %1540 = vmatpush.bf16.msra.mxu0 0
    %1541 = vmatpush.bf16.msra.mxu0 0
    %1542 = vmatpush.bf16.msra.mxu0 %v1533
    %1543 = vmatmul.bf16.gmra.mxu0 %v1530
    %v1544 = vpop.f32.mrf.mxu0
    %v1545 = vadd.f32 0.0, %v1544
    %v1546 = vpop.f32.mrf.mxu0
    %1547 = vdwg.mxu0
    %1548 = vrot.lane.b32.xlu0 %v1257, 48
    %v1549 = vpop.permute.xlu0 %1548
    %v1551 = vsel %vm343, %v1526, 0
    %v1554 = vsel %vm416, %v1549, 0
    %1556 = vmatpush.bf16.msra.mxu0 0
    %1557 = vmatpush.bf16.msra.mxu0 0
    %1558 = vmatpush.bf16.msra.mxu0 0
    %1559 = vmatpush.bf16.msra.mxu0 0
    %1560 = vmatpush.bf16.msra.mxu0 0
    %1561 = vmatpush.bf16.msra.mxu0 0
    %1562 = vmatpush.bf16.msra.mxu0 0
    %1563 = vmatpush.bf16.msra.mxu0 %v1554
    %1564 = vmatmul.bf16.gmra.mxu0 %v1551
    %v1565 = vpop.f32.mrf.mxu0
    %v1566 = vadd.f32 0.0, %v1565
    %v1567 = vpop.f32.mrf.mxu0
    %1568 = vdwg.mxu0
    %1569 = vrot.lane.b32.xlu0 %v1233, 104
    %v1570 = vpop.permute.xlu0 %1569
    %1571 = vrot.lane.b32.xlu0 %v1233, 72
    %v1572 = vpop.permute.xlu0 %1571
    %v1574 = vsel %vm343, %v1570, 0
    %v1577 = vsel %vm343, %v1572, 0
    %1579 = vmatpush.bf16.xpose.msra.mxu0 0
    %1580 = vmatpush.bf16.xpose.msra.mxu0 0
    %1581 = vmatpush.bf16.xpose.msra.mxu0 0
    %1582 = vmatpush.bf16.xpose.msra.mxu0 0
    %1583 = vmatpush.bf16.xpose.msra.mxu0 0
    %1584 = vmatpush.bf16.xpose.msra.mxu0 0
    %1585 = vmatpush.bf16.xpose.msra.mxu0 0
    %1586 = vmatpush.bf16.xpose.msra.mxu0 %v1577
    %1587 = vmatmul.bf16.gmra.mxu0 %v1574
    %v1588 = vpop.f32.mrf.mxu0
    %v1589 = vadd.f32 0.0, %v1588
    %v1590 = vpop.f32.mrf.mxu0
    %1591 = vdwg.mxu0
    %1592 = vrot.lane.b32.xlu0 %v1257, 104
    %v1593 = vpop.permute.xlu0 %1592
    %1594 = vrot.lane.b32.xlu0 %v1257, 72
    %v1595 = vpop.permute.xlu0 %1594
    %v1597 = vsel %vm343, %v1593, 0
    %v1600 = vsel %vm343, %v1595, 0
    %1602 = vmatpush.bf16.xpose.msra.mxu0 0
    %1603 = vmatpush.bf16.xpose.msra.mxu0 0
    %1604 = vmatpush.bf16.xpose.msra.mxu0 0
    %1605 = vmatpush.bf16.xpose.msra.mxu0 0
    %1606 = vmatpush.bf16.xpose.msra.mxu0 0
    %1607 = vmatpush.bf16.xpose.msra.mxu0 0
    %1608 = vmatpush.bf16.xpose.msra.mxu0 0
    %1609 = vmatpush.bf16.xpose.msra.mxu0 %v1600
    %1610 = vmatmul.bf16.gmra.mxu0 %v1597
    %v1611 = vpop.f32.mrf.mxu0
    %v1612 = vadd.f32 0.0, %v1611
    %v1613 = vpop.f32.mrf.mxu0
    %1614 = vdwg.mxu0
    %v1615 = vsel %vm343, %v1589, -inf
    %1616 = vmax.xlane.f32.xlu0 %v1615
    %v1617 = vpop.xlane.xlu0 %1616
    %v1618 = vsel %vm343, %v1612, -inf
    %1619 = vmax.xlane.f32.xlu0 %v1618
    %v1620 = vpop.xlane.xlu0 %1619
    %v1621 = vsub.f32 %v1589, %v1617
    %v1622 = vsub.f32 %v1612, %v1620
    %v1623 = vmul.f32 %v1621, 1.442695
    %v1624 = vpow.pop %v1623
    %v1625 = vmul.f32 %v1622, 1.442695
    %v1626 = vpow.pop %v1625
    %v1627 = vsel %vm343, %v1624, 0.0
    %1628 = vadd.xlane.f32.xlu0 %v1627
    %v1629 = vpop.xlane.xlu0 %1628
    %v1630 = vsel %vm343, %v1626, 0.0
    %1631 = vadd.xlane.f32.xlu0 %v1630
    %v1632 = vpop.xlane.xlu0 %1631
    %v1633 = vrcp.pop %v1629
    %v1634 = vrcp.pop %v1632
    %v1635 = vmul.f32 %v1624, %v1633
    %v1636 = vmul.f32 %v1626, %v1634
    %v1637 = vpack.c.bf16 %v1635, %v1635
    %v1638 = vpack.c.bf16 %v1636, %v1636
    %1639 = vrot.lane.b32.xlu0 %v1233, 40
    %v1640 = vpop.permute.xlu0 %1639
    %v1642 = vsel %vm343, %v1637, 0
    %v1645 = vsel %vm416, %v1640, 0
    %1647 = vmatpush.bf16.msra.mxu0 0
    %1648 = vmatpush.bf16.msra.mxu0 0
    %1649 = vmatpush.bf16.msra.mxu0 0
    %1650 = vmatpush.bf16.msra.mxu0 0
    %1651 = vmatpush.bf16.msra.mxu0 0
    %1652 = vmatpush.bf16.msra.mxu0 0
    %1653 = vmatpush.bf16.msra.mxu0 0
    %1654 = vmatpush.bf16.msra.mxu0 %v1645
    %1655 = vmatmul.bf16.gmra.mxu0 %v1642
    %v1656 = vpop.f32.mrf.mxu0
    %v1657 = vadd.f32 0.0, %v1656
    %v1658 = vpop.f32.mrf.mxu0
    %1659 = vdwg.mxu0
    %1660 = vrot.lane.b32.xlu0 %v1257, 40
    %v1661 = vpop.permute.xlu0 %1660
    %v1663 = vsel %vm343, %v1638, 0
    %v1666 = vsel %vm416, %v1661, 0
    %1668 = vmatpush.bf16.msra.mxu0 0
    %1669 = vmatpush.bf16.msra.mxu0 0
    %1670 = vmatpush.bf16.msra.mxu0 0
    %1671 = vmatpush.bf16.msra.mxu0 0
    %1672 = vmatpush.bf16.msra.mxu0 0
    %1673 = vmatpush.bf16.msra.mxu0 0
    %1674 = vmatpush.bf16.msra.mxu0 0
    %1675 = vmatpush.bf16.msra.mxu0 %v1666
    %1676 = vmatmul.bf16.gmra.mxu0 %v1663
    %v1677 = vpop.f32.mrf.mxu0
    %v1678 = vadd.f32 0.0, %v1677
    %v1679 = vpop.f32.mrf.mxu0
    %1680 = vdwg.mxu0
    %1683 = vrot.lane.b32.xlu0 %v1433, 8
    %v1684 = vpop.permute.xlu0 %1683
    %1685 = vrot.lane.b32.xlu0 %v1454, 8
    %v1686 = vpop.permute.xlu0 %1685
    %1691 = vrot.lane.b32.xlu0 %v1545, 16
    %v1692 = vpop.permute.xlu0 %1691
    %1693 = vrot.lane.b32.xlu0 %v1566, 16
    %v1694 = vpop.permute.xlu0 %1693
    %1699 = vrot.lane.b32.xlu0 %v1657, 24
    %v1700 = vpop.permute.xlu0 %1699
    %1701 = vrot.lane.b32.xlu0 %v1678, 24
    %v1702 = vpop.permute.xlu0 %1701
    %v1705 = vsel %vm343, %v1321, %v1684
    %v1706 = vsel %vm343, %v1342, %v1686
    %v1707 = vsel %vm232, %v1705, %v1692
    %v1708 = vsel %vm232, %v1706, %v1694
    %v1709 = vsel %vm818, %v1707, %v1700
    %v1710 = vsel %vm818, %v1708, %v1702
    %v1711 = vpack.c.bf16 %v1710, %v1709
    %s1712 = scalar_lea.vmem [#allocation11], 16
    %v1713 = vld [vmem:[%s1712] sm:$0xf]
    %v1714 = vld [vmem:[%s1712 + $0x4] sm:$0xf]
    %v1715 = vld [vmem:[%s1712 + $0x8] sm:$0xf]
    %v1716 = vld [vmem:[%s1712 + $0xc] sm:$0xf]
    %s1717 = scalar_lea.vmem %s7, 1
    %v1718 = vld [vmem:[%s1717] sm:$0x1]
    %v1720 = vperm.slane %v1718, 0
    %v1726 = vunpack.c.l.b16 %v1713
    %v1727 = vunpack.c.l.b16 %v1714
    %v1728 = vunpack.c.l.b16 %v1715
    %v1729 = vunpack.c.l.b16 %v1716
    %v1730 = vpack.c.b16 %v1727, %v1726
    %v1731 = vpack.c.b16 %v1729, %v1728
    %v1735 = vsel %vm842, %v1711, 0
    %1737 = vmatpush.bf16.msra.mxu0 0
    %1738 = vmatpush.bf16.msra.mxu0 0
    %1739 = vmatpush.bf16.msra.mxu0 0
    %1740 = vmatpush.bf16.msra.mxu0 0
    %1741 = vmatpush.bf16.msra.mxu0 0
    %1742 = vmatpush.bf16.msra.mxu0 0
    %1743 = vmatpush.bf16.msra.mxu0 %v1731
    %1744 = vmatpush.bf16.msra.mxu0 %v1730
    %1745 = vmatmul.bf16.gmra.mxu0 %v1735
    %v1746 = vpop.f32.mrf.mxu0
    %v1747 = vadd.f32 %v1720, %v1746
    %v1748 = vpop.f32.mrf.mxu0
    %v1749 = vadd.f32 %v1720, %v1748
    %1750 = vdwg.mxu0
    %v1751 = vadd.f32 %v1142, %v1747
    %v1752 = vadd.f32 %v1143, %v1749
    %s1753 = scalar_lea.vmem %s12, 1
    %v1754 = vld [vmem:[%s1753] sm:$0x1]
    %s1755 = scalar_lea.vmem %s13, 1
    %v1756 = vld [vmem:[%s1755] sm:$0x1]
    %1757 = vadd.xlane.f32.xlu0 %v1751
    %v1758 = vpop.xlane.xlu0 %1757
    %1759 = vadd.xlane.f32.xlu0 %v1752
    %v1760 = vpop.xlane.xlu0 %1759
    %v1761 = vmul.f32 %v1758, 0.03125
    %v1762 = vmul.f32 %v1760, 0.03125
    %v1763 = vmul.f32 %v1751, %v1751
    %v1764 = vmul.f32 %v1752, %v1752
    %1765 = vadd.xlane.f32.xlu0 %v1763
    %v1766 = vpop.xlane.xlu0 %1765
    %1767 = vadd.xlane.f32.xlu0 %v1764
    %v1768 = vpop.xlane.xlu0 %1767
    %v1769 = vmul.f32 %v1766, 0.03125
    %v1770 = vmul.f32 %v1768, 0.03125
    %v1771 = vmul.f32 %v1761, %v1761
    %v1772 = vmul.f32 %v1762, %v1762
    %v1773 = vsub.f32 %v1769, %v1771
    %v1774 = vsub.f32 %v1770, %v1772
    %v1775 = vsub.f32 %v1751, %v1761
    %v1776 = vsub.f32 %v1752, %v1762
    %v1777 = vadd.f32 %v1773, 1e-05
    %v1778 = vadd.f32 %v1774, 1e-05
    %v1779 = vrsqrt.pop %v1777
    %v1780 = vmul.f32 %v1779, %v1777
    %v1781 = vmul.f32 %v1780, %v1779
    %v1782 = vmul.f32 0.5, %v1781
    %v1783 = vsub.f32 1.5, %v1782
    %v1784 = vmul.f32 %v1779, %v1783
    %vm1785 = vweird.f32 %v1777
    %vm1786 = vweird.f32 %v1779
    %vm1787 = vmor %vm1785, %vm1786
    %v1788 = vsel %vm1787, %v1779, %v1784
    %v1789 = vrsqrt.pop %v1778
    %v1790 = vmul.f32 %v1789, %v1778
    %v1791 = vmul.f32 %v1790, %v1789
    %v1792 = vmul.f32 0.5, %v1791
    %v1793 = vsub.f32 1.5, %v1792
    %v1794 = vmul.f32 %v1789, %v1793
    %vm1795 = vweird.f32 %v1778
    %vm1796 = vweird.f32 %v1789
    %vm1797 = vmor %vm1795, %vm1796
    %v1798 = vsel %vm1797, %v1789, %v1794
    %v1799 = vmul.f32 %v1775, %v1788
    %v1800 = vmul.f32 %v1776, %v1798
    %v1802 = vperm.slane %v1754, 0
    %v1804 = vmul.f32 %v1799, %v1802
    %v1805 = vmul.f32 %v1800, %v1802
    %v1807 = vperm.slane %v1756, 0
    %v1809 = vadd.f32 %v1804, %v1807
    %v1810 = vadd.f32 %v1805, %v1807
    %v1811 = vpack.c.bf16 %v1810, %v1809
    %s1812 = scalar_lea.vmem [#allocation13], 64
    %v1813 = vld [vmem:[%s1812] sm:$0xf]
    %v1814 = vld [vmem:[%s1812 + $0x4] sm:$0xf]
    %v1815 = vld [vmem:[%s1812 + $0x8] sm:$0xf]
    %v1816 = vld [vmem:[%s1812 + $0xc] sm:$0xf]
    %v1817 = vld [vmem:[%s1812 + $0x10] sm:$0xf]
    %v1818 = vld [vmem:[%s1812 + $0x14] sm:$0xf]
    %v1819 = vld [vmem:[%s1812 + $0x18] sm:$0xf]
    %v1820 = vld [vmem:[%s1812 + $0x1c] sm:$0xf]
    %v1821 = vld [vmem:[%s1812 + $0x20] sm:$0xf]
    %v1822 = vld [vmem:[%s1812 + $0x24] sm:$0xf]
    %v1823 = vld [vmem:[%s1812 + $0x28] sm:$0xf]
    %v1824 = vld [vmem:[%s1812 + $0x2c] sm:$0xf]
    %v1825 = vld [vmem:[%s1812 + $0x30] sm:$0xf]
    %v1826 = vld [vmem:[%s1812 + $0x34] sm:$0xf]
    %v1827 = vld [vmem:[%s1812 + $0x38] sm:$0xf]
    %v1828 = vld [vmem:[%s1812 + $0x3c] sm:$0xf]
    %s1829 = scalar_lea.vmem %s9, 1
    %v1830 = vld [vmem:[%s1829] sm:$0x1]
    %v1832 = vperm.slane %v1830, 0
    %v1850 = vunpack.c.l.b16 %v1813
    %v1851 = vunpack.c.l.b16 %v1814
    %v1852 = vunpack.c.l.b16 %v1815
    %v1853 = vunpack.c.l.b16 %v1816
    %v1854 = vunpack.c.l.b16 %v1817
    %v1855 = vunpack.c.l.b16 %v1818
    %v1856 = vunpack.c.l.b16 %v1819
    %v1857 = vunpack.c.l.b16 %v1820
    %v1858 = vunpack.c.l.b16 %v1821
    %v1859 = vunpack.c.l.b16 %v1822
    %v1860 = vunpack.c.l.b16 %v1823
    %v1861 = vunpack.c.l.b16 %v1824
    %v1862 = vunpack.c.l.b16 %v1825
    %v1863 = vunpack.c.l.b16 %v1826
    %v1864 = vunpack.c.l.b16 %v1827
    %v1865 = vunpack.c.l.b16 %v1828
    %v1866 = vpack.c.b16 %v1851, %v1850
    %v1867 = vpack.c.b16 %v1853, %v1852
    %v1868 = vpack.c.b16 %v1855, %v1854
    %v1869 = vpack.c.b16 %v1857, %v1856
    %v1870 = vpack.c.b16 %v1859, %v1858
    %v1871 = vpack.c.b16 %v1861, %v1860
    %v1872 = vpack.c.b16 %v1863, %v1862
    %v1873 = vpack.c.b16 %v1865, %v1864
    %1882 = vmatpush.bf16.msra.mxu0 %v1873
    %1883 = vmatpush.bf16.msra.mxu0 %v1872
    %1884 = vmatpush.bf16.msra.mxu0 %v1871
    %1885 = vmatpush.bf16.msra.mxu0 %v1870
    %1886 = vmatpush.bf16.msra.mxu0 %v1869
    %1887 = vmatpush.bf16.msra.mxu0 %v1868
    %1888 = vmatpush.bf16.msra.mxu0 %v1867
    %1889 = vmatpush.bf16.msra.mxu0 %v1866
    %1890 = vmatmul.bf16.gmra.mxu0 %v1811
    %v1891 = vpop.f32.mrf.mxu0
    %v1892 = vadd.f32 %v1832, %v1891
    %v1893 = vpop.f32.mrf.mxu0
    %v1894 = vadd.f32 %v1832, %v1893
    %1895 = vdwg.mxu0
    %v1896 = vmax.f32 %v1892, 0.0
    %v1897 = vmax.f32 %v1894, 0.0
    %v1898 = vpack.c.bf16 %v1897, %v1896
    %s1899 = scalar_lea.vmem [#allocation14], 64
    %v1900 = vld [vmem:[%s1899] sm:$0xf]
    %v1901 = vld [vmem:[%s1899 + $0x4] sm:$0xf]
    %v1902 = vld [vmem:[%s1899 + $0x8] sm:$0xf]
    %v1903 = vld [vmem:[%s1899 + $0xc] sm:$0xf]
    %v1904 = vld [vmem:[%s1899 + $0x10] sm:$0xf]
    %v1905 = vld [vmem:[%s1899 + $0x14] sm:$0xf]
    %v1906 = vld [vmem:[%s1899 + $0x18] sm:$0xf]
    %v1907 = vld [vmem:[%s1899 + $0x1c] sm:$0xf]
    %v1908 = vld [vmem:[%s1899 + $0x20] sm:$0xf]
    %v1909 = vld [vmem:[%s1899 + $0x24] sm:$0xf]
    %v1910 = vld [vmem:[%s1899 + $0x28] sm:$0xf]
    %v1911 = vld [vmem:[%s1899 + $0x2c] sm:$0xf]
    %v1912 = vld [vmem:[%s1899 + $0x30] sm:$0xf]
    %v1913 = vld [vmem:[%s1899 + $0x34] sm:$0xf]
    %v1914 = vld [vmem:[%s1899 + $0x38] sm:$0xf]
    %v1915 = vld [vmem:[%s1899 + $0x3c] sm:$0xf]
    %s1916 = scalar_lea.vmem %s11, 1
    %v1917 = vld [vmem:[%s1916] sm:$0x1]
    %v1919 = vperm.slane %v1917, 0
    %v1937 = vunpack.c.l.b16 %v1900
    %v1938 = vunpack.c.l.b16 %v1901
    %v1939 = vunpack.c.l.b16 %v1902
    %v1940 = vunpack.c.l.b16 %v1903
    %v1941 = vunpack.c.l.b16 %v1904
    %v1942 = vunpack.c.l.b16 %v1905
    %v1943 = vunpack.c.l.b16 %v1906
    %v1944 = vunpack.c.l.b16 %v1907
    %v1945 = vunpack.c.l.b16 %v1908
    %v1946 = vunpack.c.l.b16 %v1909
    %v1947 = vunpack.c.l.b16 %v1910
    %v1948 = vunpack.c.l.b16 %v1911
    %v1949 = vunpack.c.l.b16 %v1912
    %v1950 = vunpack.c.l.b16 %v1913
    %v1951 = vunpack.c.l.b16 %v1914
    %v1952 = vunpack.c.l.b16 %v1915
    %v1953 = vpack.c.b16 %v1938, %v1937
    %v1954 = vpack.c.b16 %v1940, %v1939
    %v1955 = vpack.c.b16 %v1942, %v1941
    %v1956 = vpack.c.b16 %v1944, %v1943
    %v1957 = vpack.c.b16 %v1946, %v1945
    %v1958 = vpack.c.b16 %v1948, %v1947
    %v1959 = vpack.c.b16 %v1950, %v1949
    %v1960 = vpack.c.b16 %v1952, %v1951
    %1969 = vmatpush.bf16.msra.mxu0 %v1960
    %1970 = vmatpush.bf16.msra.mxu0 %v1959
    %1971 = vmatpush.bf16.msra.mxu0 %v1958
    %1972 = vmatpush.bf16.msra.mxu0 %v1957
    %1973 = vmatpush.bf16.msra.mxu0 %v1956
    %1974 = vmatpush.bf16.msra.mxu0 %v1955
    %1975 = vmatpush.bf16.msra.mxu0 %v1954
    %1976 = vmatpush.bf16.msra.mxu0 %v1953
    %1977 = vmatmul.bf16.gmra.mxu0 %v1898
    %v1978 = vpop.f32.mrf.mxu0
    %v1979 = vadd.f32 %v1919, %v1978
    %v1980 = vpop.f32.mrf.mxu0
    %v1981 = vadd.f32 %v1919, %v1980
    %1982 = vdwg.mxu0
    %v1983 = vadd.f32 %v1809, %v1979
    %v1984 = vadd.f32 %v1810, %v1981
    %s1985 = scalar_lea.vmem [#allocation16], 1
    %v1986 = vld [vmem:[%s1985] sm:$0x1]
    %s1987 = scalar_lea.vmem %s15, 1
    %v1988 = vld [vmem:[%s1987] sm:$0x1]
    %1989 = vadd.xlane.f32.xlu0 %v1983
    %v1990 = vpop.xlane.xlu0 %1989
    %1991 = vadd.xlane.f32.xlu0 %v1984
    %v1992 = vpop.xlane.xlu0 %1991
    %v1993 = vmul.f32 %v1990, 0.03125
    %v1994 = vmul.f32 %v1992, 0.03125
    %v1995 = vmul.f32 %v1983, %v1983
    %v1996 = vmul.f32 %v1984, %v1984
    %1997 = vadd.xlane.f32.xlu0 %v1995
    %v1998 = vpop.xlane.xlu0 %1997
    %1999 = vadd.xlane.f32.xlu0 %v1996
    %v2000 = vpop.xlane.xlu0 %1999
    %v2001 = vmul.f32 %v1998, 0.03125
    %v2002 = vmul.f32 %v2000, 0.03125
    %v2003 = vmul.f32 %v1993, %v1993
    %v2004 = vmul.f32 %v1994, %v1994
    %v2005 = vsub.f32 %v2001, %v2003
    %v2006 = vsub.f32 %v2002, %v2004
    %v2007 = vsub.f32 %v1983, %v1993
    %v2008 = vsub.f32 %v1984, %v1994
    %v2009 = vadd.f32 %v2005, 1e-05
    %v2010 = vadd.f32 %v2006, 1e-05
    %v2011 = vrsqrt.pop %v2009
    %v2012 = vmul.f32 %v2011, %v2009
    %v2013 = vmul.f32 %v2012, %v2011
    %v2014 = vmul.f32 0.5, %v2013
    %v2015 = vsub.f32 1.5, %v2014
    %v2016 = vmul.f32 %v2011, %v2015
    %vm2017 = vweird.f32 %v2009
    %vm2018 = vweird.f32 %v2011
    %vm2019 = vmor %vm2017, %vm2018
    %v2020 = vsel %vm2019, %v2011, %v2016
    %v2021 = vrsqrt.pop %v2010
    %v2022 = vmul.f32 %v2021, %v2010
    %v2023 = vmul.f32 %v2022, %v2021
    %v2024 = vmul.f32 0.5, %v2023
    %v2025 = vsub.f32 1.5, %v2024
    %v2026 = vmul.f32 %v2021, %v2025
    %vm2027 = vweird.f32 %v2010
    %vm2028 = vweird.f32 %v2021
    %vm2029 = vmor %vm2027, %vm2028
    %v2030 = vsel %vm2029, %v2021, %v2026
    %v2031 = vmul.f32 %v2007, %v2020
    %v2032 = vmul.f32 %v2008, %v2030
    %v2034 = vperm.slane %v1986, 0
    %v2036 = vmul.f32 %v2031, %v2034
    %v2037 = vmul.f32 %v2032, %v2034
    %v2039 = vperm.slane %v1988, 0
    %v2041 = vadd.f32 %v2036, %v2039
    %v2042 = vadd.f32 %v2037, %v2039
    %v2043 = vadd.f32 %v2041, %v2042
    %v2044 = vrcp.pop 2.0
    %v2045 = vmul.f32 2.0, %v2044
    %v2046 = vsub.f32 1.0, %v2045
    %v2047 = vmul.f32 %v2044, %v2046
    %v2048 = vadd.f32 %v2044, %v2047
    %vm2049 = vweird.f32 %v2044
    %v2050 = vsel %vm2049, %v2044, %v2048
    %v2051 = vmul.f32 %v2043, %v2050
    %v2052 = vpack.c.bf16 %v2051, %v2051
    %v2053 = vld [vmem:[#allocation17] sm:$0xf]
    %v2054 = vld [vmem:[#allocation17 + $0x4] sm:$0xf]
    %v2055 = vld [vmem:[#allocation17 + $0x8] sm:$0xf]
    %v2056 = vld [vmem:[#allocation17 + $0xc] sm:$0xf]
    %v2057 = vld [vmem:[#allocation17 + $0x10] sm:$0xf]
    %v2058 = vld [vmem:[#allocation17 + $0x14] sm:$0xf]
    %v2059 = vld [vmem:[#allocation17 + $0x18] sm:$0xf]
    %v2060 = vld [vmem:[#allocation17 + $0x1c] sm:$0xf]
    %v2061 = vld [vmem:[#allocation17 + $0x20] sm:$0xf]
    %v2062 = vld [vmem:[#allocation17 + $0x24] sm:$0xf]
    %v2063 = vld [vmem:[#allocation17 + $0x28] sm:$0xf]
    %v2064 = vld [vmem:[#allocation17 + $0x2c] sm:$0xf]
    %v2065 = vld [vmem:[#allocation17 + $0x30] sm:$0xf]
    %v2066 = vld [vmem:[#allocation17 + $0x34] sm:$0xf]
    %v2067 = vld [vmem:[#allocation17 + $0x38] sm:$0xf]
    %v2068 = vld [vmem:[#allocation17 + $0x3c] sm:$0xf]
    %v2069 = vld [vmem:[%s17] sm:$0x1]
    %v2071 = vperm.slane %v2069, 0
    %v2089 = vunpack.c.l.b16 %v2053
    %v2090 = vunpack.c.l.b16 %v2054
    %v2091 = vunpack.c.l.b16 %v2055
    %v2092 = vunpack.c.l.b16 %v2056
    %v2093 = vunpack.c.l.b16 %v2057
    %v2094 = vunpack.c.l.b16 %v2058
    %v2095 = vunpack.c.l.b16 %v2059
    %v2096 = vunpack.c.l.b16 %v2060
    %v2097 = vunpack.c.l.b16 %v2061
    %v2098 = vunpack.c.l.b16 %v2062
    %v2099 = vunpack.c.l.b16 %v2063
    %v2100 = vunpack.c.l.b16 %v2064
    %v2101 = vunpack.c.l.b16 %v2065
    %v2102 = vunpack.c.l.b16 %v2066
    %v2103 = vunpack.c.l.b16 %v2067
    %v2104 = vunpack.c.l.b16 %v2068
    %v2105 = vpack.c.b16 %v2090, %v2089
    %v2106 = vpack.c.b16 %v2092, %v2091
    %v2107 = vpack.c.b16 %v2094, %v2093
    %v2108 = vpack.c.b16 %v2096, %v2095
    %v2109 = vpack.c.b16 %v2098, %v2097
    %v2110 = vpack.c.b16 %v2100, %v2099
    %v2111 = vpack.c.b16 %v2102, %v2101
    %v2112 = vpack.c.b16 %v2104, %v2103
    %2121 = vmatpush.bf16.msra.mxu0 %v2112
    %2122 = vmatpush.bf16.msra.mxu0 %v2111
    %2123 = vmatpush.bf16.msra.mxu0 %v2110
    %2124 = vmatpush.bf16.msra.mxu0 %v2109
    %2125 = vmatpush.bf16.msra.mxu0 %v2108
    %2126 = vmatpush.bf16.msra.mxu0 %v2107
    %2127 = vmatpush.bf16.msra.mxu0 %v2106
    %2128 = vmatpush.bf16.msra.mxu0 %v2105
    %2129 = vmatmul.bf16.gmra.mxu0 %v2052
    %v2130 = vpop.f32.mrf.mxu0
    %v2131 = vadd.f32 %v2071, %v2130
    %v2132 = vpop.f32.mrf.mxu0
    %2133 = vdwg.mxu0
    %2134 = vst [vmem:[#allocation19] sm:$0xff] %v2131
    // Predicated region
    $region114: #{tpu_custom_call.1} parent=1 // pred_check
      _
    $region115: #{tpu_custom_call.1} parent=1 // pred_check_branch
      %2136 = sbr.rel (0) target = $region117
    $region116: #{tpu_custom_call.1} parent=1 // pred_region
      %2138 = vsyncadd [#allocation4], 0
      %s2140 = sshll.u32 [#allocation19], 4
      %s2141 = int_to_ptr.vmem [resolvable:$true] %s2140
      %s2142 = sshll.u32 %s18, 4
      %s2143 = int_to_ptr.hbm [resolvable:$true] %s2142
      %2145 = dma.vmem_to_hbm [thread:$0]  %s2141, 128, %s2143, [#allocation4]
    $region117: #{tpu_custom_call.1} parent=1 // pred_fallthru
      _
    // Predicated region
    $region118: #{tpu_custom_call.1} parent=1 // pred_check
      _
    $region119: #{tpu_custom_call.1} parent=1 // pred_check_branch
      %2147 = sbr.rel (0) target = $region121
    $region120: #{tpu_custom_call.1} parent=1 // pred_region
      %2149 = dma.done [#allocation4], 128
    $region121: #{tpu_custom_call.1} parent=1 // pred_fallthru
      _
    %2150 = vsyncpa [#allocation3], 1
    %2151 = vsyncpa [#allocation6], 1
    %2152 = vsyncpa [#allocation9], 1
    %2153 = vsyncpa [#allocation12], 1
    %2154 = vsyncpa [#allocation15], 1
    %2155 = vsyncpa [#allocation18], 1
    %2156 = vsyncpa [#allocation4], 1

</llo_original>
